<compile_context>
chip_gen: v7x
topology: tpu7x:2x2x1
jax: 0.10.0
libtpu: 0.0.40
codegen_flags: <defaults>
</compile_context>

<pallas_src>
import functools

import jax
import jax.numpy as jnp
from jax import lax
from jax.experimental import pallas as pl
from jax.experimental.pallas import tpu as pltpu


NEG_SLOPE = 0.05  # GATLayer(..., alpha=0.05) -> LeakyReLU slope


def _round_up(a, b):
    return (a + b - 1) // b * b


def _mm(a, b, use_bf16):
    """MXU matmul with optional bf16 operands, f32 accumulation."""
    if use_bf16:
        a = a.astype(jnp.bfloat16)
        b = b.astype(jnp.bfloat16)
    return jnp.dot(a, b, preferred_element_type=jnp.float32)


# ----------------------------------------------------------------------------
# One GAT attention + aggregation step for a (TILE_M, N) row slab.
#   adj_tile : (TILE_M, N) f32 (0.0 where no edge)
#   xw_rows  : (TILE_M, H) f32   rows of x@W for this tile (the "left" nodes)
#   xw_full  : (N, H)      f32   x@W for all nodes (the "right" nodes / values)
# Returns (aggregated (TILE_M, H) f32, alpha (TILE_M, N) f32).
# ----------------------------------------------------------------------------
def _attention_tile(adj_tile, xw_rows, xw_full, a_l, a_r, bias, mxu_bf16):
    # edge scores e_ij = a_l . xw_i + a_r . xw_j + b   (both halves on the MXU,
    # no lane<->sublane transpose anywhere)
    el = lax.dot_general(xw_rows, a_l, (((1,), (1,)), ((), ())),
                         preferred_element_type=jnp.float32)        # (TM, 1)
    er = lax.dot_general(a_r, xw_full, (((1,), (1,)), ((), ())),
                         preferred_element_type=jnp.float32)        # (1, N)
    e = el + er + bias                                              # (TM, N)

    # LeakyReLU
    e = jnp.where(e >= 0.0, e, NEG_SLOPE * e)

    # fold the edge mask into the exp argument; row-max shift (alpha is
    # invariant to the shift, so semantics match the PyTorch module)
    mask = adj_tile != 0.0
    e = jnp.where(mask, e, -jnp.inf)
    m = jnp.max(e, axis=-1, keepdims=True)
    m = jnp.where(m == -jnp.inf, 0.0, m)          # edgeless (padded) rows
    h = jnp.exp(e - m)                            # off-edge -> exp(-inf) = 0

    hsum = jnp.sum(h, axis=-1, keepdims=True)     # scatter_add equivalent
    hsum = jnp.where(hsum == 0.0, 1.0, hsum)
    alpha = h * pl.reciprocal(hsum, approx=True)  # EUP vrcp

    # out = sparse.mm(adj * adj_att, xw); keep the adj* for weighted adjacency
    out = _mm(adj_tile * alpha, xw_full, mxu_bf16)
    return out, alpha


# ----------------------------------------------------------------------------
# Fused GNN forward kernel (3-phase row-tiled grid).
# ----------------------------------------------------------------------------
def _gnn_kernel(x_ref, adj_ref,
                w1_ref, a1l_ref, a1r_ref, b1_ref,
                w2_ref, a2l_ref, a2r_ref, b2_ref,
                wc_ref, bc_ref,
                out_ref, *rest,
                with_alpha, nclass, tile_m, mxu_bf16):
    if with_alpha:
        alpha_ref, xw1_s, xw2_s = rest
    else:
        alpha_ref = None
        xw1_s, xw2_s = rest

    p = pl.program_id(0)                       # phase
    i = pl.program_id(1)                       # row tile
    r0 = pl.multiple_of(i * tile_m, tile_m)    # first row of this tile

    # ---- phase 0: xw1 = x @ W1, staged into persistent VMEM scratch --------
    @pl.when(p == 0)
    def _():
        xw1_s[pl.ds(r0, tile_m), :] = _mm(x_ref[...], w1_ref[...], mxu_bf16)

    # ---- phase 1: layer-1 attention + aggregation, relu, stage xw2 ---------
    @pl.when(p == 1)
    def _():
        adj_t = adj_ref[...]
        agg, _ = _attention_tile(adj_t,
                                 xw1_s[pl.ds(r0, tile_m), :], xw1_s[...],
                                 a1l_ref[...], a1r_ref[...], b1_ref[0, 0],
                                 mxu_bf16)
        h1 = jnp.maximum(agg, 0.0)             # relu; dropout = identity (eval)
        xw2_s[pl.ds(r0, tile_m), :] = _mm(h1, w2_ref[...], mxu_bf16)

    # ---- phase 2: layer-2 attention + aggregation, fc, log_softmax ---------
    @pl.when(p == 2)
    def _():
        adj_t = adj_ref[...]
        agg, alpha = _attention_tile(adj_t,
                                     xw2_s[pl.ds(r0, tile_m), :], xw2_s[...],
                                     a2l_ref[...], a2r_ref[...], b2_ref[0, 0],
                                     mxu_bf16)
        if with_alpha:
            alpha_ref[...] = alpha
        h2 = jnp.maximum(agg, 0.0)
        z = _mm(h2, wc_ref[...], mxu_bf16) + bc_ref[...]      # (TM, PADC)

        # log_softmax over the first `nclass` lanes only (lanes >= nclass are
        # zero padding and are sliced off in the wrapper)
        col = lax.broadcasted_iota(jnp.int32, z.shape, 1)
        zv = jnp.where(col < nclass, z, -jnp.inf)
        zm = jnp.max(zv, axis=-1, keepdims=True)
        lse = zm + jnp.log(jnp.sum(jnp.exp(zv - zm), axis=-1, keepdims=True))
        out_ref[...] = z - lse


# ----------------------------------------------------------------------------
# Wrapper: padding, BlockSpecs, grid.
# ----------------------------------------------------------------------------
def gnn_forward(params, x, adj, return_alpha=False, tile_m=None, mxu_bf16=True):
    N, F = x.shape
    H = params["w1"].shape[1]
    C = params["wc"].shape[1]

    if tile_m is None:
        tile_m = min(256, _round_up(N, 8))     # 128 may be preferable on v7x
    assert tile_m % 8 == 0
    n_pad = _round_up(N, tile_m)
    padc = _round_up(C, 128)
    n_tiles = n_pad // tile_m

    # zero-padding: padded rows have no edges -> alpha row = 0, agg row = 0,
    # so real rows/cols are unaffected and padded outputs are sliced away.
    xp = jnp.pad(x.astype(jnp.float32), ((0, n_pad - N), (0, 0)))
    adjp = jnp.pad(adj.astype(jnp.float32), ((0, n_pad - N), (0, n_pad - N)))
    wcp = jnp.pad(params["wc"].astype(jnp.float32), ((0, 0), (0, padc - C)))
    bcp = jnp.pad(params["bc"].astype(jnp.float32), ((0, 0), (0, padc - C)))

    # dynamic index maps: pin operands to block 0 in phases where they are
    # unused -> Pallas skips the DMA when the block index does not change.
    def x_map(p, i):
        return (jnp.where(p == 0, i, 0), 0)

    def adj_map(p, i):
        return (jnp.where(p == 0, 0, i), 0)

    def out_map(p, i):
        return (jnp.where(p == 2, i, 0), 0)

    const_map = lambda p, i: (0, 0)
    smem_spec = pl.BlockSpec(memory_space=pltpu.MemorySpace.SMEM)

    in_specs = [
        pl.BlockSpec((tile_m, F), x_map),          # x
        pl.BlockSpec((tile_m, n_pad), adj_map),    # adj
        pl.BlockSpec((F, H), const_map),           # w1
        pl.BlockSpec((1, H), const_map),           # a1_l
        pl.BlockSpec((1, H), const_map),           # a1_r
        smem_spec,                                 # a1_b (scalar)
        pl.BlockSpec((H, H), const_map),           # w2
        pl.BlockSpec((1, H), const_map),           # a2_l
        pl.BlockSpec((1, H), const_map),           # a2_r
        smem_spec,                                 # a2_b (scalar)
        pl.BlockSpec((H, padc), const_map),        # wc (lane-padded)
        pl.BlockSpec((1, padc), const_map),        # bc (lane-padded)
    ]

    out_shapes = [jax.ShapeDtypeStruct((n_pad, padc), jnp.float32)]
    out_specs = [pl.BlockSpec((tile_m, padc), out_map)]
    if return_alpha:
        out_shapes.append(jax.ShapeDtypeStruct((n_pad, n_pad), jnp.float32))
        out_specs.append(pl.BlockSpec((tile_m, n_pad), out_map))

    scratch_shapes = [pltpu.VMEM((n_pad, H), jnp.float32),   # xw1
                      pltpu.VMEM((n_pad, H), jnp.float32)]   # xw2

    # VMEM budget: double-buffered streamed blocks + persistent scratch +
    # weights + elementwise temporaries + headroom.
    f32 = 4
    blocks = 2 * tile_m * (n_pad + F + padc) * f32
    if return_alpha:
        blocks += 2 * tile_m * n_pad * f32
    scratch_b = 2 * n_pad * H * f32
    weights_b = (F * H + H * H + 4 * H + H * padc + padc) * f32
    temps_b = 6 * tile_m * n_pad * f32
    vmem_bytes = int(min(max(blocks + scratch_b + weights_b + temps_b + (4 << 20),
                             16 << 20), 64 << 20))

    kernel = functools.partial(_gnn_kernel, with_alpha=return_alpha,
                               nclass=C, tile_m=tile_m, mxu_bf16=mxu_bf16)

    res = pl.pallas_call(
        kernel,
        out_shape=tuple(out_shapes),
        grid_spec=pltpu.PrefetchScalarGridSpec(
            num_scalar_prefetch=0,
            grid=(3, n_tiles),
            in_specs=in_specs,
            out_specs=tuple(out_specs),
            scratch_shapes=scratch_shapes),
        compiler_params=pltpu.CompilerParams(
            # tile axis must stay "arbitrary": later phases read scratch
            # written by all tiles of earlier phases (TC-private VMEM).
            dimension_semantics=("arbitrary", "arbitrary"),
            vmem_limit_bytes=vmem_bytes),
    )(xp, adjp,
      params["w1"], params["a1_l"], params["a1_r"], params["a1_b"],
      params["w2"], params["a2_l"], params["a2_r"], params["a2_b"],
      wcp, bcp)

    out = res[0][:N, :C]
    if return_alpha:
        return out, res[1][:N, :N]
    return out


# ----------------------------------------------------------------------------
# pure-JAX f32 reference (for correctness check)
# ----------------------------------------------------------------------------
def _gat_ref(x, adj, w, al, ar, b):
    xw = x @ w
    e = (xw @ al.T) + (xw @ ar.T).T + b[0, 0]
    e = jnp.where(e >= 0.0, e, NEG_SLOPE * e)
    mask = adj != 0.0
    h = jnp.where(mask, jnp.exp(e), 0.0)
    hsum = jnp.sum(h, axis=1, keepdims=True)
    hsum = jnp.where(hsum == 0.0, 1.0, hsum)
    alpha = h / hsum
    return (adj * alpha) @ xw, alpha


def gnn_ref(params, x, adj):
    h1, _ = _gat_ref(x, adj, params["w1"], params["a1_l"], params["a1_r"],
                     params["a1_b"])
    h2, alpha = _gat_ref(jnp.maximum(h1, 0.0), adj, params["w2"],
                         params["a2_l"], params["a2_r"], params["a2_b"])
    z = jnp.maximum(h2, 0.0) @ params["wc"] + params["bc"]
    return jax.nn.log_softmax(z, axis=1), alpha


# ----------------------------------------------------------------------------
# deterministic parameter / input construction
# ----------------------------------------------------------------------------
def _uniform(key, shape, fan_in):
    bound = 1.0 / jnp.sqrt(jnp.float32(fan_in))
    return jax.random.uniform(key, shape, jnp.float32, -bound, bound)


def init_params(key, nfeat, nhid, nclass):
    ks = jax.random.split(key, 8)
    return {
        # GAT layer 1
        "w1":   _uniform(ks[0], (nfeat, nhid), nfeat),        # fc (no bias)
        "a1_l": _uniform(ks[1], (1, nhid), 2 * nhid),
        "a1_r": _uniform(ks[2], (1, nhid), 2 * nhid),
        "a1_b": _uniform(ks[3], (1, 1), 2 * nhid),
        # GAT layer 2
        "w2":   _uniform(ks[4], (nhid, nhid), nhid),
        "a2_l": _uniform(ks[5], (1, nhid), 2 * nhid),
        "a2_r": _uniform(ks[6], (1, nhid), 2 * nhid),
        "a2_b": _uniform(ks[7], (1, 1), 2 * nhid),
        # final classifier
        "wc":   _uniform(jax.random.fold_in(key, 100), (nhid, nclass), nhid),
        "bc":   _uniform(jax.random.fold_in(key, 101), (1, nclass), nhid),
    }


def make_adj(key, n):
    # random sparse-ish symmetric adjacency with self-loops, values 1.0
    m = jax.random.bernoulli(key, 0.25, (n, n)).astype(jnp.float32)
    m = jnp.maximum(m, m.T)
    m = jnp.maximum(m, jnp.eye(n, dtype=jnp.float32))
    return m


if __name__ == "__main__":
    N, NFEAT, NHID, NCLASS = 50, 32, 32, 7
    TILE_M = 16   # -> n_pad = 64, 4 row tiles, 3-phase grid = (3, 4)

    key = jax.random.PRNGKey(0)
    kx, kadj, kp = jax.random.split(key, 3)

    x = jax.random.normal(kx, (N, NFEAT), jnp.float32)
    adj = make_adj(kadj, N)
    params = init_params(kp, NFEAT, NHID, NCLASS)

    out_ref, alpha_ref = gnn_ref(params, x, adj)

    # --- f32-MXU path: tight semantics check against the pure-JAX reference ---
    out, alpha = gnn_forward(params, x, adj, return_alpha=True,
                             tile_m=TILE_M, mxu_bf16=False)
    out = jax.block_until_ready(out)
    alpha = jax.block_until_ready(alpha)

    assert out.shape == (N, NCLASS)
    assert alpha.shape == (N, N)
    assert jnp.allclose(jnp.sum(jnp.exp(out), axis=1), 1.0, atol=1e-4)
    assert jnp.allclose(jnp.sum(alpha, axis=1), 1.0, atol=5e-3)
    assert jnp.allclose(out, out_ref, atol=5e-3, rtol=5e-3)
    assert jnp.allclose(alpha, alpha_ref, atol=5e-3, rtol=5e-3)

    # --- no-alpha variant (only the (N, C) output; no alpha store) ---
    out2 = jax.block_until_ready(
        gnn_forward(params, x, adj, tile_m=TILE_M, mxu_bf16=False))
    assert jnp.allclose(out2, out, atol=1e-5)

    # --- bf16-MXU fast path (default): looser tolerances vs f32 reference ---
    out_bf, alpha_bf = gnn_forward(params, x, adj, return_alpha=True,
                                   tile_m=TILE_M, mxu_bf16=True)
    out_bf = jax.block_until_ready(out_bf)
    alpha_bf = jax.block_until_ready(alpha_bf)
    assert jnp.allclose(jnp.sum(jnp.exp(out_bf), axis=1), 1.0, atol=1e-3)
    assert jnp.allclose(jnp.sum(alpha_bf, axis=1), 1.0, atol=1e-2)
    assert jnp.allclose(out_bf, out_ref, atol=0.1, rtol=0.1)
    assert jnp.allclose(alpha_bf, alpha_ref, atol=0.03)

    print("KERNEL_OK")
</pallas_src>

<mosaic_0001>
module attributes {stable_mosaic.version = 11 : i64} {
  func.func @_gnn_kernel(%arg0: i32, %arg1: i32, %arg2: memref<16x32xf32, #tpu.memory_space<vmem>>, %arg3: memref<16x64xf32, #tpu.memory_space<vmem>>, %arg4: memref<32x32xf32, #tpu.memory_space<vmem>>, %arg5: memref<1x32xf32, #tpu.memory_space<vmem>>, %arg6: memref<1x32xf32, #tpu.memory_space<vmem>>, %arg7: memref<1x1xf32, #tpu.memory_space<smem>>, %arg8: memref<32x32xf32, #tpu.memory_space<vmem>>, %arg9: memref<1x32xf32, #tpu.memory_space<vmem>>, %arg10: memref<1x32xf32, #tpu.memory_space<vmem>>, %arg11: memref<1x1xf32, #tpu.memory_space<smem>>, %arg12: memref<32x128xf32, #tpu.memory_space<vmem>>, %arg13: memref<1x128xf32, #tpu.memory_space<vmem>>, %arg14: memref<16x128xf32, #tpu.memory_space<vmem>>, %arg15: memref<16x64xf32, #tpu.memory_space<vmem>>, %arg16: memref<64x32xf32, #tpu.memory_space<vmem>>, %arg17: memref<64x32xf32, #tpu.memory_space<vmem>>) attributes {dimension_semantics = [#tpu.dimension_semantics<arbitrary>, #tpu.dimension_semantics<arbitrary>], iteration_bounds = array<i64: 3, 4>, scalar_prefetch = 0 : i64, scratch_operands = 2 : i64, tpu.core_type = #tpu.core_type<tc>, window_params = [{transform_indices = @transform_0, window_bounds = array<i64: 16, 32>}, {transform_indices = @transform_1, window_bounds = array<i64: 16, 64>}, {pipeline_mode = #tpu.pipeline_mode<synchronous>, transform_indices = @transform_2, window_bounds = array<i64: 32, 32>}, {pipeline_mode = #tpu.pipeline_mode<synchronous>, transform_indices = @transform_3, window_bounds = array<i64: 1, 32>}, {pipeline_mode = #tpu.pipeline_mode<synchronous>, transform_indices = @transform_4, window_bounds = array<i64: 1, 32>}, {transform_indices = @transform_5, window_bounds = array<i64: 1, 1>}, {pipeline_mode = #tpu.pipeline_mode<synchronous>, transform_indices = @transform_6, window_bounds = array<i64: 32, 32>}, {pipeline_mode = #tpu.pipeline_mode<synchronous>, transform_indices = @transform_7, window_bounds = array<i64: 1, 32>}, {pipeline_mode = #tpu.pipeline_mode<synchronous>, transform_indices = @transform_8, window_bounds = array<i64: 1, 32>}, {transform_indices = @transform_9, window_bounds = array<i64: 1, 1>}, {pipeline_mode = #tpu.pipeline_mode<synchronous>, transform_indices = @transform_10, window_bounds = array<i64: 32, 128>}, {pipeline_mode = #tpu.pipeline_mode<synchronous>, transform_indices = @transform_11, window_bounds = array<i64: 1, 128>}, {transform_indices = @transform_12, window_bounds = array<i64: 16, 128>}, {transform_indices = @transform_13, window_bounds = array<i64: 16, 64>}]} {
    %c16_i32 = arith.constant 16 : i32
    %0 = arith.muli %arg1, %c16_i32 : i32
    %1 = tpu.assume_multiple %0, 16 : i32
    %c0_i32 = arith.constant 0 : i32
    %2 = arith.cmpi eq, %arg0, %c0_i32 : i32
    %3 = arith.extui %2 : i1 to i32
    %c0_i32_0 = arith.constant 0 : i32
    %4 = arith.cmpi ne, %3, %c0_i32_0 : i32
    scf.if %4 {
      %c0 = arith.constant 0 : index
      %c0_3 = arith.constant 0 : index
      %11 = vector.load %arg2[%c0, %c0_3] : memref<16x32xf32, #tpu.memory_space<vmem>>, vector<16x32xf32>
      %c0_4 = arith.constant 0 : index
      %c0_5 = arith.constant 0 : index
      %12 = vector.load %arg4[%c0_4, %c0_5] : memref<32x32xf32, #tpu.memory_space<vmem>>, vector<32x32xf32>
      %cst = arith.constant dense<0.000000e+00> : vector<16x32xf32>
      %13 = tpu.matmul %11, %12, %cst {dimension_numbers = #tpu.dot_dimension_numbers<[1], [0], [0], [1], [0, 0, 1, 1], [], []>} : vector<16x32xf32>, vector<32x32xf32>, vector<16x32xf32> -> vector<16x32xf32>
      %14 = arith.index_cast %1 : i32 to index
      %c0_6 = arith.constant 0 : index
      %15 = vector.load %arg16[%14, %c0_6] : memref<64x32xf32, #tpu.memory_space<vmem>>, vector<16x32xf32>
      tpu.vector_store %arg16[%14, %c0_6], %13 {strides = array<i32>} : memref<64x32xf32, #tpu.memory_space<vmem>>, vector<16x32xf32>,
    } else {
    }
    %c1_i32 = arith.constant 1 : i32
    %5 = arith.cmpi eq, %arg0, %c1_i32 : i32
    %6 = arith.extui %5 : i1 to i32
    %c0_i32_1 = arith.constant 0 : i32
    %7 = arith.cmpi ne, %6, %c0_i32_1 : i32
    scf.if %7 {
      %c0 = arith.constant 0 : index
      %c0_3 = arith.constant 0 : index
      %11 = vector.load %arg3[%c0, %c0_3] : memref<16x64xf32, #tpu.memory_space<vmem>>, vector<16x64xf32>
      %12 = arith.index_cast %1 : i32 to index
      %c0_4 = arith.constant 0 : index
      %13 = vector.load %arg16[%12, %c0_4] : memref<64x32xf32, #tpu.memory_space<vmem>>, vector<16x32xf32>
      %c0_5 = arith.constant 0 : index
      %c0_6 = arith.constant 0 : index
      %14 = vector.load %arg16[%c0_5, %c0_6] : memref<64x32xf32, #tpu.memory_space<vmem>>, vector<64x32xf32>
      %c0_7 = arith.constant 0 : index
      %c0_8 = arith.constant 0 : index
      %15 = vector.load %arg5[%c0_7, %c0_8] : memref<1x32xf32, #tpu.memory_space<vmem>>, vector<1x32xf32>
      %c0_9 = arith.constant 0 : index
      %c0_10 = arith.constant 0 : index
      %16 = vector.load %arg6[%c0_9, %c0_10] : memref<1x32xf32, #tpu.memory_space<vmem>>, vector<1x32xf32>
      %c0_11 = arith.constant 0 : index
      %c0_12 = arith.constant 0 : index
      %17 = memref.load %arg7[%c0_11, %c0_12] : memref<1x1xf32, #tpu.memory_space<smem>>
      %cst = arith.constant dense<0.000000e+00> : vector<16x1xf32>
      %18 = tpu.matmul %13, %15, %cst {dimension_numbers = #tpu.dot_dimension_numbers<[1], [1], [0], [0], [0, 0, 1, 0], [], []>} : vector<16x32xf32>, vector<1x32xf32>, vector<16x1xf32> -> vector<16x1xf32>
      %cst_13 = arith.constant dense<0.000000e+00> : vector<1x64xf32>
      %19 = tpu.matmul %16, %14, %cst_13 {dimension_numbers = #tpu.dot_dimension_numbers<[1], [1], [0], [0], [0, 0, 1, 0], [], []>} : vector<1x32xf32>, vector<64x32xf32>, vector<1x64xf32> -> vector<1x64xf32>
      %20 = vector.broadcast %18 : vector<16x1xf32> to vector<16x64xf32>
      %21 = vector.broadcast %19 : vector<1x64xf32> to vector<16x64xf32>
      %22 = arith.addf %20, %21 : vector<16x64xf32>
      %23 = vector.broadcast %17 : f32 to vector<16x64xf32>
      %24 = arith.addf %22, %23 : vector<16x64xf32>
      %cst_14 = arith.constant 0.000000e+00 : f32
      %25 = vector.broadcast %cst_14 : f32 to vector<16x64xf32>
      %26 = arith.cmpf oge, %24, %25 : vector<16x64xf32>
      %cst_15 = arith.constant 5.000000e-02 : f32
      %27 = vector.broadcast %cst_15 : f32 to vector<16x64xf32>
      %28 = arith.mulf %27, %24 : vector<16x64xf32>
      %29 = arith.select %26, %24, %28 : vector<16x64xi1>, vector<16x64xf32>
      %cst_16 = arith.constant 0.000000e+00 : f32
      %30 = vector.broadcast %cst_16 : f32 to vector<16x64xf32>
      %31 = arith.cmpf one, %11, %30 : vector<16x64xf32>
      %cst_17 = arith.constant 0xFF800000 : f32
      %32 = vector.broadcast %cst_17 : f32 to vector<16x64xf32>
      %33 = arith.select %31, %29, %32 : vector<16x64xi1>, vector<16x64xf32>
      %cst_18 = arith.constant dense<0xFF800000> : vector<16xf32>
      %34 = vector.multi_reduction <maximumf>, %33, %cst_18 [1] : vector<16x64xf32> to vector<16xf32>
      %35 = vector.shape_cast %34 : vector<16xf32> to vector<16x1xf32>
      %cst_19 = arith.constant 0xFF800000 : f32
      %36 = vector.broadcast %cst_19 : f32 to vector<16x1xf32>
      %37 = arith.cmpf oeq, %35, %36 : vector<16x1xf32>
      %cst_20 = arith.constant 0.000000e+00 : f32
      %38 = vector.broadcast %cst_20 : f32 to vector<16x1xf32>
      %39 = arith.select %37, %38, %35 : vector<16x1xi1>, vector<16x1xf32>
      %40 = vector.broadcast %39 : vector<16x1xf32> to vector<16x64xf32>
      %41 = arith.subf %33, %40 : vector<16x64xf32>
      %42 = math.exp %41 : vector<16x64xf32>
      %cst_21 = arith.constant dense<0.000000e+00> : vector<16xf32>
      %43 = vector.multi_reduction <add>, %42, %cst_21 [1] : vector<16x64xf32> to vector<16xf32>
      %44 = vector.shape_cast %43 : vector<16xf32> to vector<16x1xf32>
      %cst_22 = arith.constant 0.000000e+00 : f32
      %45 = vector.broadcast %cst_22 : f32 to vector<16x1xf32>
      %46 = arith.cmpf oeq, %44, %45 : vector<16x1xf32>
      %cst_23 = arith.constant 1.000000e+00 : f32
      %47 = vector.broadcast %cst_23 : f32 to vector<16x1xf32>
      %48 = arith.select %46, %47, %44 : vector<16x1xi1>, vector<16x1xf32>
      %49 = tpu.reciprocal %48 {approx = true} : vector<16x1xf32> -> vector<16x1xf32>
      %50 = vector.broadcast %49 : vector<16x1xf32> to vector<16x64xf32>
      %51 = arith.mulf %42, %50 : vector<16x64xf32>
      %52 = arith.mulf %11, %51 : vector<16x64xf32>
      %cst_24 = arith.constant dense<0.000000e+00> : vector<16x32xf32>
      %53 = tpu.matmul %52, %14, %cst_24 {dimension_numbers = #tpu.dot_dimension_numbers<[1], [0], [0], [1], [0, 0, 1, 1], [], []>} : vector<16x64xf32>, vector<64x32xf32>, vector<16x32xf32> -> vector<16x32xf32>
      %cst_25 = arith.constant 0.000000e+00 : f32
      %54 = vector.broadcast %cst_25 : f32 to vector<16x32xf32>
      %55 = arith.maximumf %53, %54 : vector<16x32xf32>
      %c0_26 = arith.constant 0 : index
      %c0_27 = arith.constant 0 : index
      %56 = vector.load %arg8[%c0_26, %c0_27] : memref<32x32xf32, #tpu.memory_space<vmem>>, vector<32x32xf32>
      %cst_28 = arith.constant dense<0.000000e+00> : vector<16x32xf32>
      %57 = tpu.matmul %55, %56, %cst_28 {dimension_numbers = #tpu.dot_dimension_numbers<[1], [0], [0], [1], [0, 0, 1, 1], [], []>} : vector<16x32xf32>, vector<32x32xf32>, vector<16x32xf32> -> vector<16x32xf32>
      %58 = arith.index_cast %1 : i32 to index
      %c0_29 = arith.constant 0 : index
      %59 = vector.load %arg17[%58, %c0_29] : memref<64x32xf32, #tpu.memory_space<vmem>>, vector<16x32xf32>
      tpu.vector_store %arg17[%58, %c0_29], %57 {strides = array<i32>} : memref<64x32xf32, #tpu.memory_space<vmem>>, vector<16x32xf32>,
    } else {
    }
    %c2_i32 = arith.constant 2 : i32
    %8 = arith.cmpi eq, %arg0, %c2_i32 : i32
    %9 = arith.extui %8 : i1 to i32
    %c0_i32_2 = arith.constant 0 : i32
    %10 = arith.cmpi ne, %9, %c0_i32_2 : i32
    scf.if %10 {
      %c0 = arith.constant 0 : index
      %c0_3 = arith.constant 0 : index
      %11 = vector.load %arg3[%c0, %c0_3] : memref<16x64xf32, #tpu.memory_space<vmem>>, vector<16x64xf32>
      %12 = arith.index_cast %1 : i32 to index
      %c0_4 = arith.constant 0 : index
      %13 = vector.load %arg17[%12, %c0_4] : memref<64x32xf32, #tpu.memory_space<vmem>>, vector<16x32xf32>
      %c0_5 = arith.constant 0 : index
      %c0_6 = arith.constant 0 : index
      %14 = vector.load %arg17[%c0_5, %c0_6] : memref<64x32xf32, #tpu.memory_space<vmem>>, vector<64x32xf32>
      %c0_7 = arith.constant 0 : index
      %c0_8 = arith.constant 0 : index
      %15 = vector.load %arg9[%c0_7, %c0_8] : memref<1x32xf32, #tpu.memory_space<vmem>>, vector<1x32xf32>
      %c0_9 = arith.constant 0 : index
      %c0_10 = arith.constant 0 : index
      %16 = vector.load %arg10[%c0_9, %c0_10] : memref<1x32xf32, #tpu.memory_space<vmem>>, vector<1x32xf32>
      %c0_11 = arith.constant 0 : index
      %c0_12 = arith.constant 0 : index
      %17 = memref.load %arg11[%c0_11, %c0_12] : memref<1x1xf32, #tpu.memory_space<smem>>
      %cst = arith.constant dense<0.000000e+00> : vector<16x1xf32>
      %18 = tpu.matmul %13, %15, %cst {dimension_numbers = #tpu.dot_dimension_numbers<[1], [1], [0], [0], [0, 0, 1, 0], [], []>} : vector<16x32xf32>, vector<1x32xf32>, vector<16x1xf32> -> vector<16x1xf32>
      %cst_13 = arith.constant dense<0.000000e+00> : vector<1x64xf32>
      %19 = tpu.matmul %16, %14, %cst_13 {dimension_numbers = #tpu.dot_dimension_numbers<[1], [1], [0], [0], [0, 0, 1, 0], [], []>} : vector<1x32xf32>, vector<64x32xf32>, vector<1x64xf32> -> vector<1x64xf32>
      %20 = vector.broadcast %18 : vector<16x1xf32> to vector<16x64xf32>
      %21 = vector.broadcast %19 : vector<1x64xf32> to vector<16x64xf32>
      %22 = arith.addf %20, %21 : vector<16x64xf32>
      %23 = vector.broadcast %17 : f32 to vector<16x64xf32>
      %24 = arith.addf %22, %23 : vector<16x64xf32>
      %cst_14 = arith.constant 0.000000e+00 : f32
      %25 = vector.broadcast %cst_14 : f32 to vector<16x64xf32>
      %26 = arith.cmpf oge, %24, %25 : vector<16x64xf32>
      %cst_15 = arith.constant 5.000000e-02 : f32
      %27 = vector.broadcast %cst_15 : f32 to vector<16x64xf32>
      %28 = arith.mulf %27, %24 : vector<16x64xf32>
      %29 = arith.select %26, %24, %28 : vector<16x64xi1>, vector<16x64xf32>
      %cst_16 = arith.constant 0.000000e+00 : f32
      %30 = vector.broadcast %cst_16 : f32 to vector<16x64xf32>
      %31 = arith.cmpf one, %11, %30 : vector<16x64xf32>
      %cst_17 = arith.constant 0xFF800000 : f32
      %32 = vector.broadcast %cst_17 : f32 to vector<16x64xf32>
      %33 = arith.select %31, %29, %32 : vector<16x64xi1>, vector<16x64xf32>
      %cst_18 = arith.constant dense<0xFF800000> : vector<16xf32>
      %34 = vector.multi_reduction <maximumf>, %33, %cst_18 [1] : vector<16x64xf32> to vector<16xf32>
      %35 = vector.shape_cast %34 : vector<16xf32> to vector<16x1xf32>
      %cst_19 = arith.constant 0xFF800000 : f32
      %36 = vector.broadcast %cst_19 : f32 to vector<16x1xf32>
      %37 = arith.cmpf oeq, %35, %36 : vector<16x1xf32>
      %cst_20 = arith.constant 0.000000e+00 : f32
      %38 = vector.broadcast %cst_20 : f32 to vector<16x1xf32>
      %39 = arith.select %37, %38, %35 : vector<16x1xi1>, vector<16x1xf32>
      %40 = vector.broadcast %39 : vector<16x1xf32> to vector<16x64xf32>
      %41 = arith.subf %33, %40 : vector<16x64xf32>
      %42 = math.exp %41 : vector<16x64xf32>
      %cst_21 = arith.constant dense<0.000000e+00> : vector<16xf32>
      %43 = vector.multi_reduction <add>, %42, %cst_21 [1] : vector<16x64xf32> to vector<16xf32>
      %44 = vector.shape_cast %43 : vector<16xf32> to vector<16x1xf32>
      %cst_22 = arith.constant 0.000000e+00 : f32
      %45 = vector.broadcast %cst_22 : f32 to vector<16x1xf32>
      %46 = arith.cmpf oeq, %44, %45 : vector<16x1xf32>
      %cst_23 = arith.constant 1.000000e+00 : f32
      %47 = vector.broadcast %cst_23 : f32 to vector<16x1xf32>
      %48 = arith.select %46, %47, %44 : vector<16x1xi1>, vector<16x1xf32>
      %49 = tpu.reciprocal %48 {approx = true} : vector<16x1xf32> -> vector<16x1xf32>
      %50 = vector.broadcast %49 : vector<16x1xf32> to vector<16x64xf32>
      %51 = arith.mulf %42, %50 : vector<16x64xf32>
      %52 = arith.mulf %11, %51 : vector<16x64xf32>
      %cst_24 = arith.constant dense<0.000000e+00> : vector<16x32xf32>
      %53 = tpu.matmul %52, %14, %cst_24 {dimension_numbers = #tpu.dot_dimension_numbers<[1], [0], [0], [1], [0, 0, 1, 1], [], []>} : vector<16x64xf32>, vector<64x32xf32>, vector<16x32xf32> -> vector<16x32xf32>
      %c0_25 = arith.constant 0 : index
      %c0_26 = arith.constant 0 : index
      %54 = vector.load %arg15[%c0_25, %c0_26] : memref<16x64xf32, #tpu.memory_space<vmem>>, vector<16x64xf32>
      tpu.vector_store %arg15[%c0_25, %c0_26], %51 {strides = array<i32>} : memref<16x64xf32, #tpu.memory_space<vmem>>, vector<16x64xf32>,
      %cst_27 = arith.constant 0.000000e+00 : f32
      %55 = vector.broadcast %cst_27 : f32 to vector<16x32xf32>
      %56 = arith.maximumf %53, %55 : vector<16x32xf32>
      %c0_28 = arith.constant 0 : index
      %c0_29 = arith.constant 0 : index
      %57 = vector.load %arg12[%c0_28, %c0_29] : memref<32x128xf32, #tpu.memory_space<vmem>>, vector<32x128xf32>
      %cst_30 = arith.constant dense<0.000000e+00> : vector<16x128xf32>
      %58 = tpu.matmul %56, %57, %cst_30 {dimension_numbers = #tpu.dot_dimension_numbers<[1], [0], [0], [1], [0, 0, 1, 1], [], []>} : vector<16x32xf32>, vector<32x128xf32>, vector<16x128xf32> -> vector<16x128xf32>
      %c0_31 = arith.constant 0 : index
      %c0_32 = arith.constant 0 : index
      %59 = vector.load %arg13[%c0_31, %c0_32] : memref<1x128xf32, #tpu.memory_space<vmem>>, vector<1x128xf32>
      %60 = vector.broadcast %59 : vector<1x128xf32> to vector<16x128xf32>
      %61 = arith.addf %58, %60 : vector<16x128xf32>
      %62 = tpu.iota {dimensions = array<i32: 1>} : vector<16x128xi32>
      %c7_i32 = arith.constant 7 : i32
      %63 = vector.broadcast %c7_i32 : i32 to vector<16x128xi32>
      %64 = arith.cmpi slt, %62, %63 : vector<16x128xi32>
      %cst_33 = arith.constant 0xFF800000 : f32
      %65 = vector.broadcast %cst_33 : f32 to vector<16x128xf32>
      %66 = arith.select %64, %61, %65 : vector<16x128xi1>, vector<16x128xf32>
      %cst_34 = arith.constant dense<0xFF800000> : vector<16xf32>
      %67 = vector.multi_reduction <maximumf>, %66, %cst_34 [1] : vector<16x128xf32> to vector<16xf32>
      %68 = vector.shape_cast %67 : vector<16xf32> to vector<16x1xf32>
      %69 = vector.broadcast %68 : vector<16x1xf32> to vector<16x128xf32>
      %70 = arith.subf %66, %69 : vector<16x128xf32>
      %71 = math.exp %70 : vector<16x128xf32>
      %cst_35 = arith.constant dense<0.000000e+00> : vector<16xf32>
      %72 = vector.multi_reduction <add>, %71, %cst_35 [1] : vector<16x128xf32> to vector<16xf32>
      %73 = vector.shape_cast %72 : vector<16xf32> to vector<16x1xf32>
      %74 = math.log %73 : vector<16x1xf32>
      %75 = arith.addf %68, %74 : vector<16x1xf32>
      %76 = vector.broadcast %75 : vector<16x1xf32> to vector<16x128xf32>
      %77 = arith.subf %61, %76 : vector<16x128xf32>
      %c0_36 = arith.constant 0 : index
      %c0_37 = arith.constant 0 : index
      %78 = vector.load %arg14[%c0_36, %c0_37] : memref<16x128xf32, #tpu.memory_space<vmem>>, vector<16x128xf32>
      tpu.vector_store %arg14[%c0_36, %c0_37], %77 {strides = array<i32>} : memref<16x128xf32, #tpu.memory_space<vmem>>, vector<16x128xf32>,
    } else {
    }
    return
  }
  func.func @transform_0(%arg0: i32, %arg1: i32) -> (i32, i32) {
    %c0_i32 = arith.constant 0 : i32
    %0 = arith.cmpi eq, %arg0, %c0_i32 : i32
    %c0_i32_0 = arith.constant 0 : i32
    %1 = arith.select %0, %arg1, %c0_i32_0 : i32
    %c0_i32_1 = arith.constant 0 : i32
    %c0_i32_2 = arith.constant 0 : i32
    return %1, %c0_i32_1 : i32, i32
  }
  func.func @transform_1(%arg0: i32, %arg1: i32) -> (i32, i32) {
    %c0_i32 = arith.constant 0 : i32
    %0 = arith.cmpi eq, %arg0, %c0_i32 : i32
    %c0_i32_0 = arith.constant 0 : i32
    %1 = arith.select %0, %c0_i32_0, %arg1 : i32
    %c0_i32_1 = arith.constant 0 : i32
    %c0_i32_2 = arith.constant 0 : i32
    return %1, %c0_i32_1 : i32, i32
  }
  func.func @transform_2(%arg0: i32, %arg1: i32) -> (i32, i32) {
    %c0_i32 = arith.constant 0 : i32
    %c0_i32_0 = arith.constant 0 : i32
    %c0_i32_1 = arith.constant 0 : i32
    return %c0_i32, %c0_i32_0 : i32, i32
  }
  func.func @transform_3(%arg0: i32, %arg1: i32) -> (i32, i32) {
    %c0_i32 = arith.constant 0 : i32
    %c0_i32_0 = arith.constant 0 : i32
    %c0_i32_1 = arith.constant 0 : i32
    return %c0_i32, %c0_i32_0 : i32, i32
  }
  func.func @transform_4(%arg0: i32, %arg1: i32) -> (i32, i32) {
    %c0_i32 = arith.constant 0 : i32
    %c0_i32_0 = arith.constant 0 : i32
    %c0_i32_1 = arith.constant 0 : i32
    return %c0_i32, %c0_i32_0 : i32, i32
  }
  func.func @transform_5(%arg0: i32, %arg1: i32) -> (i32, i32) {
    %c0_i32 = arith.constant 0 : i32
    %c0_i32_0 = arith.constant 0 : i32
    %c0_i32_1 = arith.constant 0 : i32
    return %c0_i32, %c0_i32_0 : i32, i32
  }
  func.func @transform_6(%arg0: i32, %arg1: i32) -> (i32, i32) {
    %c0_i32 = arith.constant 0 : i32
    %c0_i32_0 = arith.constant 0 : i32
    %c0_i32_1 = arith.constant 0 : i32
    return %c0_i32, %c0_i32_0 : i32, i32
  }
  func.func @transform_7(%arg0: i32, %arg1: i32) -> (i32, i32) {
    %c0_i32 = arith.constant 0 : i32
    %c0_i32_0 = arith.constant 0 : i32
    %c0_i32_1 = arith.constant 0 : i32
    return %c0_i32, %c0_i32_0 : i32, i32
  }
  func.func @transform_8(%arg0: i32, %arg1: i32) -> (i32, i32) {
    %c0_i32 = arith.constant 0 : i32
    %c0_i32_0 = arith.constant 0 : i32
    %c0_i32_1 = arith.constant 0 : i32
    return %c0_i32, %c0_i32_0 : i32, i32
  }
  func.func @transform_9(%arg0: i32, %arg1: i32) -> (i32, i32) {
    %c0_i32 = arith.constant 0 : i32
    %c0_i32_0 = arith.constant 0 : i32
    %c0_i32_1 = arith.constant 0 : i32
    return %c0_i32, %c0_i32_0 : i32, i32
  }
  func.func @transform_10(%arg0: i32, %arg1: i32) -> (i32, i32) {
    %c0_i32 = arith.constant 0 : i32
    %c0_i32_0 = arith.constant 0 : i32
    %c0_i32_1 = arith.constant 0 : i32
    return %c0_i32, %c0_i32_0 : i32, i32
  }
  func.func @transform_11(%arg0: i32, %arg1: i32) -> (i32, i32) {
    %c0_i32 = arith.constant 0 : i32
    %c0_i32_0 = arith.constant 0 : i32
    %c0_i32_1 = arith.constant 0 : i32
    return %c0_i32, %c0_i32_0 : i32, i32
  }
  func.func @transform_12(%arg0: i32, %arg1: i32) -> (i32, i32) {
    %c2_i32 = arith.constant 2 : i32
    %0 = arith.cmpi eq, %arg0, %c2_i32 : i32
    %c0_i32 = arith.constant 0 : i32
    %1 = arith.select %0, %arg1, %c0_i32 : i32
    %c0_i32_0 = arith.constant 0 : i32
    %c0_i32_1 = arith.constant 0 : i32
    return %1, %c0_i32_0 : i32, i32
  }
  func.func @transform_13(%arg0: i32, %arg1: i32) -> (i32, i32) {
    %c2_i32 = arith.constant 2 : i32
    %0 = arith.cmpi eq, %arg0, %c2_i32 : i32
    %c0_i32 = arith.constant 0 : i32
    %1 = arith.select %0, %arg1, %c0_i32 : i32
    %c0_i32_0 = arith.constant 0 : i32
    %c0_i32_1 = arith.constant 0 : i32
    return %1, %c0_i32_0 : i32, i32
  }
}

</mosaic_0001>

<llo_original>
// kernel: tpu_custom_call.1
$region0: #{tpu_custom_call.1}
  #allocation0 [shape = 'u32[]', space=smem, size = 0x4, offset = 0x4, fixed_abs, tag = 'smem constant byte address 0x4 - core index']
  #allocation1 [shape = 'u32[144,128]{1,0:T(1,128)}', space=vmem, size = 0x12000, scoped, tag = 'internal scratch']
  #allocation2 [shape = 'f32[64,32]{1,0:T(8,128)}', space=vmem, size = 0x8000, scoped, tag = 'scratch operand']
  #allocation3 [shape = 'f32[64,32]{1,0:T(8,128)}', space=vmem, size = 0x8000, scoped, tag = 'scratch operand']
  #allocation4 [shape = 'f32[1,1]{1,0:T(1,128)S(6)}', space=smem, size = 0x200, scoped, tag = 'scoped memory for tpu_custom_call.1']
  #allocation5 [shape = 'f32[1,1]{1,0:T(1,128)S(6)}', space=smem, size = 0x200, scoped, tag = 'scoped memory for tpu_custom_call.1']
  %s0 = inlined_call_operand.vmem [shape: f32[64,32], index: 0, kind: input, shape index: {}]
  %s1 = inlined_call_operand.vmem [shape: f32[64,64], index: 1, kind: input, shape index: {}]
  %s2 = inlined_call_operand.vmem [shape: f32[32,32], index: 2, kind: input, shape index: {}]
  %s3 = inlined_call_operand.vmem [shape: f32[1,32], index: 3, kind: input, shape index: {}]
  %s4 = inlined_call_operand.vmem [shape: f32[1,32], index: 4, kind: input, shape index: {}]
  %s5 = inlined_call_operand.<no memory space> [shape: f32[1,1], index: 5, kind: input, shape index: {}]
  %s6 = inlined_call_operand.hbm [shape: f32[32,32], index: 6, kind: input, shape index: {}]
  %s7 = inlined_call_operand.hbm [shape: f32[1,32], index: 7, kind: input, shape index: {}]
  %s8 = inlined_call_operand.hbm [shape: f32[1,32], index: 8, kind: input, shape index: {}]
  %s9 = inlined_call_operand.<no memory space> [shape: f32[1,1], index: 9, kind: input, shape index: {}]
  %s10 = inlined_call_operand.vmem [shape: f32[32,128], index: 10, kind: input, shape index: {}]
  %s11 = inlined_call_operand.vmem [shape: f32[1,128], index: 11, kind: input, shape index: {}]
  %s12 = inlined_call_operand.hbm [shape: f32[64,128], index: 12, kind: output, shape index: {0}]
  %s13 = inlined_call_operand.hbm [shape: f32[64,64], index: 13, kind: output, shape index: {1}]
  %14 = xla_tuple %s12, %s13
  %s15 = sld [smem:[#allocation0]]
  $region113: #{tpu_custom_call.1} parent=0
    _
  %s17 = ssub.s32 1, %s15
  %s18 = scalar_select 0, %s17, %s15
  %19 = sst [smem:[#allocation4]] %s5
  %20 = sst [smem:[#allocation5]] %s9
  $region1: #{tpu_custom_call.1} parent=0
    #allocation6 [shape = 'u8[16384]{0}', space=vmem, size = 0x4000, scoped, tag = 'input window, operand 6, single buffered']
    #allocation7 [shape = 's32[2]{0}', space=sflag, size = 0x8, scoped, tag = 'scoped memory for tpu_custom_call.1']
    #allocation8 [shape = 's32[2]{0}', space=sflag, size = 0x8, scoped, tag = 'scoped memory for tpu_custom_call.1']
    #allocation9 [shape = 'u8[512]{0}', space=vmem, size = 0x400, scoped, tag = 'input window, operand 7, single buffered']
    #allocation10 [shape = 's32[1]{0}', space=sflag, size = 0x4, scoped, tag = 'scoped memory for tpu_custom_call.1']
    #allocation11 [shape = 'u8[512]{0}', space=vmem, size = 0x400, scoped, tag = 'input window, operand 8, single buffered']
    #allocation12 [shape = 'u8[16384]{0}', space=vmem, size = 0x4000, scoped, tag = 'output window, operand 0']
    #allocation13 [shape = 'u8[16384]{0}', space=vmem, size = 0x4000, scoped, tag = 'output window, operand 1']
    #allocation14 [shape = 's32[2]{0}', space=sflag, size = 0x8, scoped, tag = 'scoped memory for tpu_custom_call.1']
    %21 = vsyncpa [#allocation7], 0
    %22 = vsyncpa [#allocation10], 0
    %23 = vsyncpa [#allocation8], 0
    %s24 = scalar_lea.sflag [#allocation8], 1
    %25 = vsyncpa %s24, 0
    %26 = vsyncpa [#allocation14], 0
    %s27 = scalar_lea.sflag [#allocation14], 1
    %28 = vsyncpa %s27, 0
    loop: start=0, step=1, limit=14
    $region2: #{tpu_custom_call.1} parent=1 // loop_pre_header
      _
    $region3: #{tpu_custom_call.1} parent=1 // loop_header
      %s30 = sphi 0, %s34
      %p31 = scmp.ge.s32.totalorder %s30, 14
      %s37 = sphi 0, %s49
      %s38 = sphi 0, %s45
      %s39 = sphi 0, %s37
      %s40 = sphi 0, %s38
      %s41 = sphi 0, %s39
      %s42 = sphi 0, %s40
      %s56 = sphi 0, %s58
      %s59 = sphi 0, %s56
      %s60 = sphi 0, %s59
      %s76 = sphi 0, %s60
      %s86 = sphi 0, %s88
      %s89 = sphi 0, %s86
      %s90 = sphi 0, %s89
      %s106 = sphi 0, %s90
      %s110 = sphi 0, %s110
      %s112 = sphi 0, %s110
      %s113 = sphi 0, %s112
      %s127 = sphi 0, %s113
      %s131 = sphi 0, %s131
      %s133 = sphi 0, %s131
      %s134 = sphi 0, %s133
      %s148 = sphi 0, %s134
      %s152 = sphi 0, %s152
      %s154 = sphi 0, %s152
      %s155 = sphi 0, %s154
      %s169 = sphi 0, %s155
      %s173 = sphi 0, %s173
      %s175 = sphi 0, %s173
      %s176 = sphi 0, %s175
      %s190 = sphi 0, %s176
      %s194 = sphi 0, %s194
      %s196 = sphi 0, %s194
      %s197 = sphi 0, %s196
      %s211 = sphi 0, %s197
      %s215 = sphi 0, %s215
      %s217 = sphi 0, %s215
      %s218 = sphi 0, %s217
      %s232 = sphi 0, %s218
      %s236 = sphi 0, %s236
      %s238 = sphi 0, %s236
      %s239 = sphi 0, %s238
      %s253 = sphi 0, %s239
      %s257 = sphi 0, %s257
      %s259 = sphi 0, %s257
      %s260 = sphi 0, %s259
      %s274 = sphi 0, %s260
      %s278 = sphi 0, %s278
      %s280 = sphi 0, %s278
      %s281 = sphi 0, %s280
      %s295 = sphi 0, %s281
      %s299 = sphi 0, %s299
      %s301 = sphi 0, %s299
      %s302 = sphi 0, %s301
      %s316 = sphi 0, %s302
      %s326 = sphi 0, %s328
      %s329 = sphi 0, %s326
      %s330 = sphi 0, %s329
      %s346 = sphi 0, %s330
      %s356 = sphi 0, %s358
      %s359 = sphi 0, %s356
      %s360 = sphi 0, %s359
      %s376 = sphi 0, %s360
    $region4: #{tpu_custom_call.1} parent=1 // loop_header_branch
      %33 = sbr.rel (%p31) target = $region8
    $region5: #{tpu_custom_call.1} parent=1 // loop_body
      %s35 = ssub.s32 %s30, 1
      %s36 = ssub.s32 %s30, 2
      %s43 = sadd.s32 1, %s38
      %p44 = scmp.ge.s32.totalorder %s43, 4
      %s45 = scalar_select %p44, 0, %s43
      %s46 = sadd.s32 1, %s37
      %s47 = scalar_select %p44, %s46, %s37
      %p48 = scmp.ge.s32.totalorder %s47, 3
      %s49 = scalar_select %p48, 0, %s47
      %p50 = scmp.eq.s32.totalorder %s37, 0
      %s51 = scalar_select %p50, %s38, 0
      %p52 = scmp.eq.s32.totalorder %s49, 0
      %s53 = scalar_select %p52, %s45, 0
      %s54 = ssub.s32 %s51, %s53
      %p55 = scmp.eq.s32.totalorder %s54, 0
      %s57 = sadd.s32 %s56, 1
      %s58 = scalar_select %p55, %s56, %s57
      %p61 = pneg %p55
      %p62 = scmp.eq.s32.totalorder %s30, 11
      %p63 = por %p61, %p62
      %p64 = scmp.ne.s32.totalorder %s56, %s59
      %p65 = scmp.eq.s32.totalorder %s30, 0
      %p66 = por %p64, %p65
      %p67 = scmp.ne.s32.totalorder %s56, %s59
      %p68 = scmp.eq.s32.totalorder %s35, 11
      %p69 = por %p67, %p68
      %p70 = scmp.ne.s32.totalorder %s59, %s60
      %p71 = scmp.eq.s32.totalorder %s35, 0
      %p72 = por %p70, %p71
      %p73 = scmp.ne.s32.totalorder %s59, %s60
      %p74 = scmp.eq.s32.totalorder %s36, 11
      %p75 = por %p73, %p74
      %p77 = scmp.ne.s32.totalorder %s60, %s76
      %p78 = scmp.eq.s32.totalorder %s36, 0
      %p79 = por %p77, %p78
      %p80 = scmp.eq.s32.totalorder %s37, 0
      %s81 = scalar_select %p80, 0, %s38
      %p82 = scmp.eq.s32.totalorder %s49, 0
      %s83 = scalar_select %p82, 0, %s45
      %s84 = ssub.s32 %s81, %s83
      %p85 = scmp.eq.s32.totalorder %s84, 0
      %s87 = sadd.s32 %s86, 1
      %s88 = scalar_select %p85, %s86, %s87
      %p91 = pneg %p85
      %p92 = scmp.eq.s32.totalorder %s30, 11
      %p93 = por %p91, %p92
      %p94 = scmp.ne.s32.totalorder %s86, %s89
      %p95 = scmp.eq.s32.totalorder %s30, 0
      %p96 = por %p94, %p95
      %p97 = scmp.ne.s32.totalorder %s86, %s89
      %p98 = scmp.eq.s32.totalorder %s35, 11
      %p99 = por %p97, %p98
      %p100 = scmp.ne.s32.totalorder %s89, %s90
      %p101 = scmp.eq.s32.totalorder %s35, 0
      %p102 = por %p100, %p101
      %p103 = scmp.ne.s32.totalorder %s89, %s90
      %p104 = scmp.eq.s32.totalorder %s36, 11
      %p105 = por %p103, %p104
      %p107 = scmp.ne.s32.totalorder %s90, %s106
      %p108 = scmp.eq.s32.totalorder %s36, 0
      %p109 = por %p107, %p108
      %s111 = sadd.s32 %s110, 1
      %p114 = scmp.eq.s32.totalorder %s30, 11
      %p115 = scmp.ne.s32.totalorder %s110, %s112
      %p116 = scmp.eq.s32.totalorder %s30, 0
      %p117 = por %p115, %p116
      %p118 = scmp.ne.s32.totalorder %s110, %s112
      %p119 = scmp.eq.s32.totalorder %s35, 11
      %p120 = por %p118, %p119
      %p121 = scmp.ne.s32.totalorder %s112, %s113
      %p122 = scmp.eq.s32.totalorder %s35, 0
      %p123 = por %p121, %p122
      %p124 = scmp.ne.s32.totalorder %s112, %s113
      %p125 = scmp.eq.s32.totalorder %s36, 11
      %p126 = por %p124, %p125
      %p128 = scmp.ne.s32.totalorder %s113, %s127
      %p129 = scmp.eq.s32.totalorder %s36, 0
      %p130 = por %p128, %p129
      %s132 = sadd.s32 %s131, 1
      %p135 = scmp.eq.s32.totalorder %s30, 11
      %p136 = scmp.ne.s32.totalorder %s131, %s133
      %p137 = scmp.eq.s32.totalorder %s30, 0
      %p138 = por %p136, %p137
      %p139 = scmp.ne.s32.totalorder %s131, %s133
      %p140 = scmp.eq.s32.totalorder %s35, 11
      %p141 = por %p139, %p140
      %p142 = scmp.ne.s32.totalorder %s133, %s134
      %p143 = scmp.eq.s32.totalorder %s35, 0
      %p144 = por %p142, %p143
      %p145 = scmp.ne.s32.totalorder %s133, %s134
      %p146 = scmp.eq.s32.totalorder %s36, 11
      %p147 = por %p145, %p146
      %p149 = scmp.ne.s32.totalorder %s134, %s148
      %p150 = scmp.eq.s32.totalorder %s36, 0
      %p151 = por %p149, %p150
      %s153 = sadd.s32 %s152, 1
      %p156 = scmp.eq.s32.totalorder %s30, 11
      %p157 = scmp.ne.s32.totalorder %s152, %s154
      %p158 = scmp.eq.s32.totalorder %s30, 0
      %p159 = por %p157, %p158
      %p160 = scmp.ne.s32.totalorder %s152, %s154
      %p161 = scmp.eq.s32.totalorder %s35, 11
      %p162 = por %p160, %p161
      %p163 = scmp.ne.s32.totalorder %s154, %s155
      %p164 = scmp.eq.s32.totalorder %s35, 0
      %p165 = por %p163, %p164
      %p166 = scmp.ne.s32.totalorder %s154, %s155
      %p167 = scmp.eq.s32.totalorder %s36, 11
      %p168 = por %p166, %p167
      %p170 = scmp.ne.s32.totalorder %s155, %s169
      %p171 = scmp.eq.s32.totalorder %s36, 0
      %p172 = por %p170, %p171
      %s174 = sadd.s32 %s173, 1
      %p177 = scmp.eq.s32.totalorder %s30, 11
      %p178 = scmp.ne.s32.totalorder %s173, %s175
      %p179 = scmp.eq.s32.totalorder %s30, 0
      %p180 = por %p178, %p179
      %p181 = scmp.ne.s32.totalorder %s173, %s175
      %p182 = scmp.eq.s32.totalorder %s35, 11
      %p183 = por %p181, %p182
      %p184 = scmp.ne.s32.totalorder %s175, %s176
      %p185 = scmp.eq.s32.totalorder %s35, 0
      %p186 = por %p184, %p185
      %p187 = scmp.ne.s32.totalorder %s175, %s176
      %p188 = scmp.eq.s32.totalorder %s36, 11
      %p189 = por %p187, %p188
      %p191 = scmp.ne.s32.totalorder %s176, %s190
      %p192 = scmp.eq.s32.totalorder %s36, 0
      %p193 = por %p191, %p192
      %s195 = sadd.s32 %s194, 1
      %p198 = scmp.eq.s32.totalorder %s30, 11
      %p199 = scmp.ne.s32.totalorder %s194, %s196
      %p200 = scmp.eq.s32.totalorder %s30, 0
      %p201 = por %p199, %p200
      %p202 = scmp.ne.s32.totalorder %s194, %s196
      %p203 = scmp.eq.s32.totalorder %s35, 11
      %p204 = por %p202, %p203
      %p205 = scmp.ne.s32.totalorder %s196, %s197
      %p206 = scmp.eq.s32.totalorder %s35, 0
      %p207 = por %p205, %p206
      %p208 = scmp.ne.s32.totalorder %s196, %s197
      %p209 = scmp.eq.s32.totalorder %s36, 11
      %p210 = por %p208, %p209
      %p212 = scmp.ne.s32.totalorder %s197, %s211
      %p213 = scmp.eq.s32.totalorder %s36, 0
      %p214 = por %p212, %p213
      %s216 = sadd.s32 %s215, 1
      %p219 = scmp.eq.s32.totalorder %s30, 11
      %p220 = scmp.ne.s32.totalorder %s215, %s217
      %p221 = scmp.eq.s32.totalorder %s30, 0
      %p222 = por %p220, %p221
      %p223 = scmp.ne.s32.totalorder %s215, %s217
      %p224 = scmp.eq.s32.totalorder %s35, 11
      %p225 = por %p223, %p224
      %p226 = scmp.ne.s32.totalorder %s217, %s218
      %p227 = scmp.eq.s32.totalorder %s35, 0
      %p228 = por %p226, %p227
      %p229 = scmp.ne.s32.totalorder %s217, %s218
      %p230 = scmp.eq.s32.totalorder %s36, 11
      %p231 = por %p229, %p230
      %p233 = scmp.ne.s32.totalorder %s218, %s232
      %p234 = scmp.eq.s32.totalorder %s36, 0
      %p235 = por %p233, %p234
      %s237 = sadd.s32 %s236, 1
      %p240 = scmp.eq.s32.totalorder %s30, 11
      %p241 = scmp.ne.s32.totalorder %s236, %s238
      %p242 = scmp.eq.s32.totalorder %s30, 0
      %p243 = por %p241, %p242
      %p244 = scmp.ne.s32.totalorder %s236, %s238
      %p245 = scmp.eq.s32.totalorder %s35, 11
      %p246 = por %p244, %p245
      %p247 = scmp.ne.s32.totalorder %s238, %s239
      %p248 = scmp.eq.s32.totalorder %s35, 0
      %p249 = por %p247, %p248
      %p250 = scmp.ne.s32.totalorder %s238, %s239
      %p251 = scmp.eq.s32.totalorder %s36, 11
      %p252 = por %p250, %p251
      %p254 = scmp.ne.s32.totalorder %s239, %s253
      %p255 = scmp.eq.s32.totalorder %s36, 0
      %p256 = por %p254, %p255
      %s258 = sadd.s32 %s257, 1
      %p261 = scmp.eq.s32.totalorder %s30, 11
      %p262 = scmp.ne.s32.totalorder %s257, %s259
      %p263 = scmp.eq.s32.totalorder %s30, 0
      %p264 = por %p262, %p263
      %p265 = scmp.ne.s32.totalorder %s257, %s259
      %p266 = scmp.eq.s32.totalorder %s35, 11
      %p267 = por %p265, %p266
      %p268 = scmp.ne.s32.totalorder %s259, %s260
      %p269 = scmp.eq.s32.totalorder %s35, 0
      %p270 = por %p268, %p269
      %p271 = scmp.ne.s32.totalorder %s259, %s260
      %p272 = scmp.eq.s32.totalorder %s36, 11
      %p273 = por %p271, %p272
      %p275 = scmp.ne.s32.totalorder %s260, %s274
      %p276 = scmp.eq.s32.totalorder %s36, 0
      %p277 = por %p275, %p276
      %s279 = sadd.s32 %s278, 1
      %p282 = scmp.eq.s32.totalorder %s30, 11
      %p283 = scmp.ne.s32.totalorder %s278, %s280
      %p284 = scmp.eq.s32.totalorder %s30, 0
      %p285 = por %p283, %p284
      %p286 = scmp.ne.s32.totalorder %s278, %s280
      %p287 = scmp.eq.s32.totalorder %s35, 11
      %p288 = por %p286, %p287
      %p289 = scmp.ne.s32.totalorder %s280, %s281
      %p290 = scmp.eq.s32.totalorder %s35, 0
      %p291 = por %p289, %p290
      %p292 = scmp.ne.s32.totalorder %s280, %s281
      %p293 = scmp.eq.s32.totalorder %s36, 11
      %p294 = por %p292, %p293
      %p296 = scmp.ne.s32.totalorder %s281, %s295
      %p297 = scmp.eq.s32.totalorder %s36, 0
      %p298 = por %p296, %p297
      %s300 = sadd.s32 %s299, 1
      %p303 = scmp.eq.s32.totalorder %s30, 11
      %p304 = scmp.ne.s32.totalorder %s299, %s301
      %p305 = scmp.eq.s32.totalorder %s30, 0
      %p306 = por %p304, %p305
      %p307 = scmp.ne.s32.totalorder %s299, %s301
      %p308 = scmp.eq.s32.totalorder %s35, 11
      %p309 = por %p307, %p308
      %p310 = scmp.ne.s32.totalorder %s301, %s302
      %p311 = scmp.eq.s32.totalorder %s35, 0
      %p312 = por %p310, %p311
      %p313 = scmp.ne.s32.totalorder %s301, %s302
      %p314 = scmp.eq.s32.totalorder %s36, 11
      %p315 = por %p313, %p314
      %p317 = scmp.ne.s32.totalorder %s302, %s316
      %p318 = scmp.eq.s32.totalorder %s36, 0
      %p319 = por %p317, %p318
      %p320 = scmp.eq.s32.totalorder %s37, 2
      %s321 = scalar_select %p320, %s38, 0
      %p322 = scmp.eq.s32.totalorder %s49, 2
      %s323 = scalar_select %p322, %s45, 0
      %s324 = ssub.s32 %s321, %s323
      %p325 = scmp.eq.s32.totalorder %s324, 0
      %s327 = sadd.s32 %s326, 1
      %s328 = scalar_select %p325, %s326, %s327
      %p331 = pneg %p325
      %p332 = scmp.eq.s32.totalorder %s30, 11
      %p333 = por %p331, %p332
      %p334 = scmp.ne.s32.totalorder %s326, %s329
      %p335 = scmp.eq.s32.totalorder %s30, 0
      %p336 = por %p334, %p335
      %p337 = scmp.ne.s32.totalorder %s326, %s329
      %p338 = scmp.eq.s32.totalorder %s35, 11
      %p339 = por %p337, %p338
      %p340 = scmp.ne.s32.totalorder %s329, %s330
      %p341 = scmp.eq.s32.totalorder %s35, 0
      %p342 = por %p340, %p341
      %p343 = scmp.ne.s32.totalorder %s329, %s330
      %p344 = scmp.eq.s32.totalorder %s36, 11
      %p345 = por %p343, %p344
      %p347 = scmp.ne.s32.totalorder %s330, %s346
      %p348 = scmp.eq.s32.totalorder %s36, 0
      %p349 = por %p347, %p348
      %p350 = scmp.eq.s32.totalorder %s37, 2
      %s351 = scalar_select %p350, %s38, 0
      %p352 = scmp.eq.s32.totalorder %s49, 2
      %s353 = scalar_select %p352, %s45, 0
      %s354 = ssub.s32 %s351, %s353
      %p355 = scmp.eq.s32.totalorder %s354, 0
      %s357 = sadd.s32 %s356, 1
      %s358 = scalar_select %p355, %s356, %s357
      %p361 = pneg %p355
      %p362 = scmp.eq.s32.totalorder %s30, 11
      %p363 = por %p361, %p362
      %p364 = scmp.ne.s32.totalorder %s356, %s359
      %p365 = scmp.eq.s32.totalorder %s30, 0
      %p366 = por %p364, %p365
      %p367 = scmp.ne.s32.totalorder %s356, %s359
      %p368 = scmp.eq.s32.totalorder %s35, 11
      %p369 = por %p367, %p368
      %p370 = scmp.ne.s32.totalorder %s359, %s360
      %p371 = scmp.eq.s32.totalorder %s35, 0
      %p372 = por %p370, %p371
      %p373 = scmp.ne.s32.totalorder %s359, %s360
      %p374 = scmp.eq.s32.totalorder %s36, 11
      %p375 = por %p373, %p374
      %p377 = scmp.ne.s32.totalorder %s360, %s376
      %p378 = scmp.eq.s32.totalorder %s36, 0
      %p379 = por %p377, %p378
      %p380 = scmp.le.s32.totalorder 1, %s30
      %p381 = scmp.lt.s32.totalorder %s30, 13
      %p382 = pnand %p380, %p381
      %p383 = pneg %p382
      // Predicated region
      $region9: #{tpu_custom_call.1} parent=5 // pred_check
        _
      $region10: #{tpu_custom_call.1} parent=5 // pred_check_branch
        %385 = sbr.rel (%p382) target = $region12
      $region11: #{tpu_custom_call.1} parent=5 // pred_region
        %s386 = ssub.s32 %s30, 1
        // Predicated region
        $region13: #{tpu_custom_call.1} parent=11 // pred_check
          %p387 = pneg %p123
        $region14: #{tpu_custom_call.1} parent=11 // pred_check_branch
          %389 = sbr.rel (%p387) target = $region16
        $region15: #{tpu_custom_call.1} parent=11 // pred_region
          _
        $region16: #{tpu_custom_call.1} parent=11 // pred_fallthru
          _
        // Predicated region
        $region17: #{tpu_custom_call.1} parent=11 // pred_check
          %p390 = pneg %p144
        $region18: #{tpu_custom_call.1} parent=11 // pred_check_branch
          %392 = sbr.rel (%p390) target = $region20
        $region19: #{tpu_custom_call.1} parent=11 // pred_region
          _
        $region20: #{tpu_custom_call.1} parent=11 // pred_fallthru
          _
        // Predicated region
        $region21: #{tpu_custom_call.1} parent=11 // pred_check
          %p393 = pneg %p165
        $region22: #{tpu_custom_call.1} parent=11 // pred_check_branch
          %395 = sbr.rel (%p393) target = $region24
        $region23: #{tpu_custom_call.1} parent=11 // pred_region
          _
        $region24: #{tpu_custom_call.1} parent=11 // pred_fallthru
          _
        // Predicated region
        $region25: #{tpu_custom_call.1} parent=11 // pred_check
          %p396 = pneg %p186
        $region26: #{tpu_custom_call.1} parent=11 // pred_check_branch
          %398 = sbr.rel (%p396) target = $region28
        $region27: #{tpu_custom_call.1} parent=11 // pred_region
          _
        $region28: #{tpu_custom_call.1} parent=11 // pred_fallthru
          _
        // Predicated region
        $region29: #{tpu_custom_call.1} parent=11 // pred_check
          %p399 = pneg %p207
        $region30: #{tpu_custom_call.1} parent=11 // pred_check_branch
          %401 = sbr.rel (%p399) target = $region32
        $region31: #{tpu_custom_call.1} parent=11 // pred_region
          %s403 = ssub.s32 512, 512
          %404 = vsyncadd [#allocation7], %s403
          %s405 = sshll.u32 [#allocation6], 4
          %s406 = int_to_ptr.vmem [resolvable:$true] %s405
          %411 = dma.hbm_to_vmem [thread:$0]  %s6, 512, %s406, [#allocation7], 128, 128, 8
        $region32: #{tpu_custom_call.1} parent=11 // pred_fallthru
          _
        // Predicated region
        $region33: #{tpu_custom_call.1} parent=11 // pred_check
          %p412 = pneg %p228
        $region34: #{tpu_custom_call.1} parent=11 // pred_check_branch
          %414 = sbr.rel (%p412) target = $region36
        $region35: #{tpu_custom_call.1} parent=11 // pred_region
          %s416 = ssub.s32 16, 16
          %417 = vsyncadd [#allocation10], %s416
          %s419 = sshll.u32 [#allocation9], 4
          %s420 = int_to_ptr.vmem [resolvable:$true] %s419
          %422 = dma.hbm_to_vmem [thread:$0]  %s7, 16, %s420, [#allocation10]
        $region36: #{tpu_custom_call.1} parent=11 // pred_fallthru
          _
        // Predicated region
        $region37: #{tpu_custom_call.1} parent=11 // pred_check
          %p423 = pneg %p249
        $region38: #{tpu_custom_call.1} parent=11 // pred_check_branch
          %425 = sbr.rel (%p423) target = $region40
        $region39: #{tpu_custom_call.1} parent=11 // pred_region
          %s427 = ssub.s32 16, 16
          %428 = vsyncadd [#allocation10], %s427
          %s430 = sshll.u32 [#allocation11], 4
          %s431 = int_to_ptr.vmem [resolvable:$true] %s430
          %433 = dma.hbm_to_vmem [thread:$0]  %s8, 16, %s431, [#allocation10]
        $region40: #{tpu_custom_call.1} parent=11 // pred_fallthru
          _
        // Predicated region
        $region41: #{tpu_custom_call.1} parent=11 // pred_check
          %p434 = pneg %p270
        $region42: #{tpu_custom_call.1} parent=11 // pred_check_branch
          %436 = sbr.rel (%p434) target = $region44
        $region43: #{tpu_custom_call.1} parent=11 // pred_region
          _
        $region44: #{tpu_custom_call.1} parent=11 // pred_fallthru
          _
        // Predicated region
        $region45: #{tpu_custom_call.1} parent=11 // pred_check
          %p437 = pneg %p291
        $region46: #{tpu_custom_call.1} parent=11 // pred_check_branch
          %439 = sbr.rel (%p437) target = $region48
        $region47: #{tpu_custom_call.1} parent=11 // pred_region
          _
        $region48: #{tpu_custom_call.1} parent=11 // pred_fallthru
          _
        // Predicated region
        $region49: #{tpu_custom_call.1} parent=11 // pred_check
          %p440 = pneg %p312
        $region50: #{tpu_custom_call.1} parent=11 // pred_check_branch
          %442 = sbr.rel (%p440) target = $region52
        $region51: #{tpu_custom_call.1} parent=11 // pred_region
          _
        $region52: #{tpu_custom_call.1} parent=11 // pred_fallthru
          _
      $region12: #{tpu_custom_call.1} parent=5 // pred_fallthru
        _
      %p443 = scmp.lt.s32.totalorder %s30, 12
      // Predicated region
      $region53: #{tpu_custom_call.1} parent=5 // pred_check
        %p444 = pneg %p443
      $region54: #{tpu_custom_call.1} parent=5 // pred_check_branch
        %446 = sbr.rel (%p444) target = $region56
      $region55: #{tpu_custom_call.1} parent=5 // pred_region
        // Predicated region
        $region57: #{tpu_custom_call.1} parent=55 // pred_check
          %p447 = pneg %p66
        $region58: #{tpu_custom_call.1} parent=55 // pred_check_branch
          %449 = sbr.rel (%p447) target = $region60
        $region59: #{tpu_custom_call.1} parent=55 // pred_region
          %p450 = scmp.eq.s32.totalorder %s37, 0
          %s451 = scalar_select %p450, %s38, 0
          %s452 = smul.u32 2, %s451
          %p453 = scmp.lt.s32.totalorder %s452, 7
          %s454 = scalar_select %p453, %s452, 7
          %s455 = smul.addr %s454, 8
          %s456 = scalar_lea.vmem %s0, %s455
          %p457 = scmp.eq.s32.totalorder %s37, 0
          %s458 = scalar_select %p457, %s38, 0
          %s459 = smul.u32 2, %s458
        $region60: #{tpu_custom_call.1} parent=55 // pred_fallthru
          _
        // Predicated region
        $region61: #{tpu_custom_call.1} parent=55 // pred_check
          %p460 = pneg %p96
        $region62: #{tpu_custom_call.1} parent=55 // pred_check_branch
          %462 = sbr.rel (%p460) target = $region64
        $region63: #{tpu_custom_call.1} parent=55 // pred_region
          %p463 = scmp.eq.s32.totalorder %s37, 0
          %s464 = scalar_select %p463, 0, %s38
          %s465 = smul.u32 2, %s464
          %p466 = scmp.lt.s32.totalorder %s465, 7
          %s467 = scalar_select %p466, %s465, 7
          %s468 = smul.addr %s467, 8
          %s469 = scalar_lea.vmem %s1, %s468
          %p470 = scmp.eq.s32.totalorder %s37, 0
          %s471 = scalar_select %p470, 0, %s38
          %s472 = smul.u32 2, %s471
        $region64: #{tpu_custom_call.1} parent=55 // pred_fallthru
          _
      $region56: #{tpu_custom_call.1} parent=5 // pred_fallthru
        _
      %p473 = scmp.le.s32.totalorder 1, %s30
      %p474 = scmp.lt.s32.totalorder %s30, 13
      %p475 = pnand %p473, %p474
      %p476 = pneg %p475
      // Predicated region
      $region65: #{tpu_custom_call.1} parent=5 // pred_check
        _
      $region66: #{tpu_custom_call.1} parent=5 // pred_check_branch
        %478 = sbr.rel (%p475) target = $region68
      $region67: #{tpu_custom_call.1} parent=5 // pred_region
        %s479 = ssub.s32 %s30, 1
        // Predicated region
        $region69: #{tpu_custom_call.1} parent=67 // pred_check
          %p480 = pneg %p207
        $region70: #{tpu_custom_call.1} parent=67 // pred_check_branch
          %482 = sbr.rel (%p480) target = $region72
        $region71: #{tpu_custom_call.1} parent=67 // pred_region
          %483 = dma.done [#allocation7], 512
        $region72: #{tpu_custom_call.1} parent=67 // pred_fallthru
          _
        // Predicated region
        $region73: #{tpu_custom_call.1} parent=67 // pred_check
          %p484 = pneg %p228
        $region74: #{tpu_custom_call.1} parent=67 // pred_check_branch
          %486 = sbr.rel (%p484) target = $region76
        $region75: #{tpu_custom_call.1} parent=67 // pred_region
          %487 = dma.done [#allocation10], 16
        $region76: #{tpu_custom_call.1} parent=67 // pred_fallthru
          _
        // Predicated region
        $region77: #{tpu_custom_call.1} parent=67 // pred_check
          %p488 = pneg %p249
        $region78: #{tpu_custom_call.1} parent=67 // pred_check_branch
          %490 = sbr.rel (%p488) target = $region80
        $region79: #{tpu_custom_call.1} parent=67 // pred_region
          %491 = dma.done [#allocation10], 16
        $region80: #{tpu_custom_call.1} parent=67 // pred_fallthru
          _
        %p492 = scmp.eq.s32.totalorder %s39, 0
        %s493 = scalar_select %p492, %s40, 0
        %s494 = smul.u32 2, %s493
        %p495 = scmp.lt.s32.totalorder %s494, 7
        %s496 = scalar_select %p495, %s494, 7
        %s497 = smul.addr %s496, 8
        %s498 = scalar_lea.vmem %s0, %s497
        %p499 = pneg %p72
        %p500 = pneg %p69
        %p501 = scmp.eq.s32.totalorder %s39, 0
        %s502 = scalar_select %p501, 0, %s40
        %s503 = smul.u32 2, %s502
        %p504 = scmp.lt.s32.totalorder %s503, 7
        %s505 = scalar_select %p504, %s503, 7
        %s506 = smul.addr %s505, 8
        %s507 = scalar_lea.vmem %s1, %s506
        %p508 = pneg %p102
        %p509 = pneg %p99
        %p510 = pneg %p123
        %p511 = pneg %p120
        %p512 = pneg %p144
        %p513 = pneg %p141
        %p514 = pneg %p165
        %p515 = pneg %p162
        %p516 = pneg %p186
        %p517 = pneg %p183
        %p518 = pneg %p207
        %p519 = pneg %p204
        %p520 = pneg %p228
        %p521 = pneg %p225
        %p522 = pneg %p249
        %p523 = pneg %p246
        %p524 = pneg %p270
        %p525 = pneg %p267
        %p526 = pneg %p291
        %p527 = pneg %p288
        %p528 = pneg %p312
        %p529 = pneg %p309
        %p530 = pneg %p342
        %p531 = pneg %p339
        %s532 = sand.u32 %s329, 1
        %s533 = scalar_lea.sflag [#allocation8], %s532
        %s534 = sand.u32 %s329, 1
        %s535 = smul.addr %s534, 16
        %s536 = scalar_lea.vmem [#allocation12], %s535
        %p537 = pneg %p372
        %p538 = pneg %p369
        %s539 = sand.u32 %s359, 1
        %s540 = scalar_lea.sflag [#allocation14], %s539
        %s541 = sand.u32 %s359, 1
        %s542 = smul.addr %s541, 16
        %s543 = scalar_lea.vmem [#allocation13], %s542
        %p544 = scmp.eq.s32.totalorder %s39, 0
        %s545 = scalar_select %p544, %s40, 0
        %s546 = smul.u32 2, %s545
        %p547 = scmp.lt.s32.totalorder %s546, 7
        %s548 = scalar_select %p547, %s546, 7
        %s549 = smul.addr %s548, 8
        %s550 = scalar_lea.vmem %s0, %s549
        %p551 = scmp.eq.s32.totalorder %s39, 0
        %s552 = scalar_select %p551, %s40, 0
        %s553 = smul.u32 2, %s552
        %p554 = scmp.eq.s32.totalorder %s39, 0
        %s555 = scalar_select %p554, 0, %s40
        %s556 = smul.u32 2, %s555
        %p557 = scmp.lt.s32.totalorder %s556, 7
        %s558 = scalar_select %p557, %s556, 7
        %s559 = smul.addr %s558, 8
        %s560 = scalar_lea.vmem %s1, %s559
        %p561 = scmp.eq.s32.totalorder %s39, 0
        %s562 = scalar_select %p561, 0, %s40
        %s563 = smul.u32 2, %s562
        %p564 = scmp.eq.s32.totalorder %s39, 2
        %s565 = scalar_select %p564, %s40, 0
        %s566 = smul.u32 2, %s565
        %p567 = scmp.eq.s32.totalorder %s39, 2
        %s568 = scalar_select %p567, %s40, 0
        %s569 = smul.u32 2, %s568
        %s570 = smul.u32 %s40, 16
        %p571 = scmp.eq.s32.totalorder %s39, 0
        // Predicated region
        $region81: #{tpu_custom_call.1} parent=67 // pred_check
          %p572 = pneg %p571
        $region82: #{tpu_custom_call.1} parent=67 // pred_check_branch
          %574 = sbr.rel (%p572) target = $region84
        $region83: #{tpu_custom_call.1} parent=67 // pred_region
          %v575 = vld [vmem:[%s550] sm:$0xff]
          %v576 = vld [vmem:[%s550 + $0x8] sm:$0xff]
          %v577 = vld [vmem:[%s2] sm:$0xff]
          %v578 = vld [vmem:[%s2 + $0x8] sm:$0xff]
          %v579 = vld [vmem:[%s2 + $0x10] sm:$0xff]
          %v580 = vld [vmem:[%s2 + $0x18] sm:$0xff]
          %vm581 = vcmask 261120
          %v583 = vsel %vm581, %v575, 0
          %v586 = vsel %vm581, %v576, 0
          %588 = vmatprep.subr.mxu0 0.0
          %589 = vmatpush1.msra.mxu0 %v577
          %590 = vmatprep.subr.mxu0 0.0
          %591 = vmatpush1.msra.mxu0 %v578
          %592 = vmatprep.subr.mxu0 0.0
          %593 = vmatpush1.msra.mxu0 %v579
          %594 = vmatprep.subr.mxu0 0.0
          %595 = vmatpush1.msra.mxu0 %v580
          %596 = vmatprep.subr.mxu0 0.0
          %597 = vmatpush1.msra.mxu0 0.0
          %598 = vmatprep.subr.mxu0 0.0
          %599 = vmatpush1.msra.mxu0 0.0
          %600 = vmatprep.subr.mxu0 0.0
          %601 = vmatpush1.msra.mxu0 0.0
          %602 = vmatprep.subr.mxu0 0.0
          %603 = vmatpush1.msra.mxu0 0.0
          %604 = vmatprep.subr.mxu0 0.0
          %605 = vmatpush1.msra.mxu0 0.0
          %606 = vmatprep.subr.mxu0 0.0
          %607 = vmatpush1.msra.mxu0 0.0
          %608 = vmatprep.subr.mxu0 0.0
          %609 = vmatpush1.msra.mxu0 0.0
          %610 = vmatprep.subr.mxu0 0.0
          %611 = vmatpush1.msra.mxu0 0.0
          %612 = vmatprep.subr.mxu0 0.0
          %613 = vmatpush1.msra.mxu0 0.0
          %614 = vmatprep.subr.mxu0 0.0
          %615 = vmatpush1.msra.mxu0 0.0
          %616 = vmatprep.subr.mxu0 0.0
          %617 = vmatpush1.msra.mxu0 0.0
          %618 = vmatprep.subr.mxu0 0.0
          %619 = vmatpush1.msra.mxu0 0.0
          %620 = vmatprep.subr.mxu0 0.0
          %621 = vmatpush1.msra.mxu0 0.0
          %622 = vmatprep.subr.mxu0 0.0
          %623 = vmatpush1.msra.mxu0 0.0
          %624 = vmatprep.subr.mxu0 0.0
          %625 = vmatpush1.msra.mxu0 0.0
          %626 = vmatprep.subr.mxu0 0.0
          %627 = vmatpush1.msra.mxu0 0.0
          %628 = vmatprep.subr.mxu0 0.0
          %629 = vmatpush1.msra.mxu0 0.0
          %630 = vmatprep.subr.mxu0 0.0
          %631 = vmatpush1.msra.mxu0 0.0
          %632 = vmatprep.subr.mxu0 0.0
          %633 = vmatpush1.msra.mxu0 0.0
          %634 = vmatprep.subr.mxu0 0.0
          %635 = vmatpush1.msra.mxu0 0.0
          %636 = vmatprep.subr.mxu0 0.0
          %637 = vmatpush1.msra.mxu0 0.0
          %638 = vmatprep.subr.mxu0 0.0
          %639 = vmatpush1.msra.mxu0 0.0
          %640 = vmatprep.subr.mxu0 0.0
          %641 = vmatpush1.msra.mxu0 0.0
          %642 = vmatprep.subr.mxu0 0.0
          %643 = vmatpush1.msra.mxu0 0.0
          %644 = vmatprep.subr.mxu0 0.0
          %645 = vmatpush1.msra.mxu0 0.0
          %646 = vmatprep.subr.mxu0 0.0
          %647 = vmatpush1.msra.mxu0 0.0
          %648 = vmatprep.subr.mxu0 0.0
          %649 = vmatpush1.msra.mxu0 0.0
          %650 = vmatprep.subr.mxu0 0.0
          %651 = vmatpush1.msra.mxu0 0.0
          %652 = vmatprep.mubr.f32.mxu0 0.0
          %653 = vmatmul.mubr.f32.gmra.mrb[0].mxu0 %v583
          %v654 = vpop.f32.mrb[0].mxu0
          %v655 = vadd.f32 0.0, %v654
          %v656 = vpop.f32.mrb[0].mxu0
          %657 = vmatprep.mubr.f32.mxu0 0.0
          %658 = vmatmul.mubr.f32.gmra.mrb[0].mxu0 %v586
          %v659 = vpop.f32.mrb[0].mxu0
          %v660 = vadd.f32 0.0, %v659
          %v661 = vpop.f32.mrb[0].mxu0
          %662 = vdwg.mxu0
          %s663 = scalar_lea.vmem [#allocation2], %s570
          %664 = vst.msk [vmem:[%s663] sm:$0xff] %vm581, %v655
          %665 = vst.msk [vmem:[%s663 + $0x8] sm:$0xff] %vm581, %v660
        $region84: #{tpu_custom_call.1} parent=67 // pred_fallthru
          _
        %p666 = scmp.eq.s32.totalorder %s39, 1
        // Predicated region
        $region85: #{tpu_custom_call.1} parent=67 // pred_check
          %p667 = pneg %p666
        $region86: #{tpu_custom_call.1} parent=67 // pred_check_branch
          %669 = sbr.rel (%p667) target = $region88
        $region87: #{tpu_custom_call.1} parent=67 // pred_region
          %v670 = vld [vmem:[%s560] sm:$0xff]
          %v671 = vld [vmem:[%s560 + $0x8] sm:$0xff]
          %s672 = scalar_lea.vmem [#allocation2], %s570
          %v673 = vld [vmem:[%s672] sm:$0xff]
          %v674 = vld [vmem:[%s672 + $0x8] sm:$0xff]
          %v675 = vld [vmem:[#allocation2] sm:$0xff]
          %v676 = vld [vmem:[#allocation2 + $0x8] sm:$0xff]
          %v677 = vld [vmem:[#allocation2 + $0x10] sm:$0xff]
          %v678 = vld [vmem:[#allocation2 + $0x18] sm:$0xff]
          %v679 = vld [vmem:[#allocation2 + $0x20] sm:$0xff]
          %v680 = vld [vmem:[#allocation2 + $0x28] sm:$0xff]
          %v681 = vld [vmem:[#allocation2 + $0x30] sm:$0xff]
          %v682 = vld [vmem:[#allocation2 + $0x38] sm:$0xff]
          %v683 = vld [vmem:[%s3] sm:$0x1]
          %v684 = vld [vmem:[%s4] sm:$0x1]
          %s685 = sld [smem:[#allocation4]]
          %v687 = vlaneseq
          %v688 = vshrl.u32 %v687, 7
          %v689 = vsub.s32 0, %v688
          %v690 = vrot.slane %v683, %v689
          %v692 = vmul.f32 %v673, %v690
          %v693 = vmul.f32 %v674, %v690
          %vm694 = vcmask 261120
          %v695 = vsel %vm694, %v692, 0.0
          %696 = vadd.xlane.f32.xlu0 %v695
          %v697 = vpop.xlane.xlu0 %696
          %v698 = vsel %vm694, %v693, 0.0
          %699 = vadd.xlane.f32.xlu0 %v698
          %v700 = vpop.xlane.xlu0 %699
          %v702 = vsel %vm694, %v684, 0
          %v705 = vsel %vm694, %v675, 0
          %v708 = vsel %vm694, %v676, 0
          %v711 = vsel %vm694, %v677, 0
          %v714 = vsel %vm694, %v678, 0
          %v717 = vsel %vm694, %v679, 0
          %v720 = vsel %vm694, %v680, 0
          %v723 = vsel %vm694, %v681, 0
          %v726 = vsel %vm694, %v682, 0
          %728 = vmatprep.subr.mxu0 0.0
          %729 = vmatpush1.xpose.msra.mxu0 %v705
          %730 = vmatprep.subr.mxu0 0.0
          %731 = vmatpush1.xpose.msra.mxu0 %v708
          %732 = vmatprep.subr.mxu0 0.0
          %733 = vmatpush1.xpose.msra.mxu0 %v711
          %734 = vmatprep.subr.mxu0 0.0
          %735 = vmatpush1.xpose.msra.mxu0 %v714
          %736 = vmatprep.subr.mxu0 0.0
          %737 = vmatpush1.xpose.msra.mxu0 %v717
          %738 = vmatprep.subr.mxu0 0.0
          %739 = vmatpush1.xpose.msra.mxu0 %v720
          %740 = vmatprep.subr.mxu0 0.0
          %741 = vmatpush1.xpose.msra.mxu0 %v723
          %742 = vmatprep.subr.mxu0 0.0
          %743 = vmatpush1.xpose.msra.mxu0 %v726
          %744 = vmatprep.subr.mxu0 0.0
          %745 = vmatpush1.xpose.msra.mxu0 0.0
          %746 = vmatprep.subr.mxu0 0.0
          %747 = vmatpush1.xpose.msra.mxu0 0.0
          %748 = vmatprep.subr.mxu0 0.0
          %749 = vmatpush1.xpose.msra.mxu0 0.0
          %750 = vmatprep.subr.mxu0 0.0
          %751 = vmatpush1.xpose.msra.mxu0 0.0
          %752 = vmatprep.subr.mxu0 0.0
          %753 = vmatpush1.xpose.msra.mxu0 0.0
          %754 = vmatprep.subr.mxu0 0.0
          %755 = vmatpush1.xpose.msra.mxu0 0.0
          %756 = vmatprep.subr.mxu0 0.0
          %757 = vmatpush1.xpose.msra.mxu0 0.0
          %758 = vmatprep.subr.mxu0 0.0
          %759 = vmatpush1.xpose.msra.mxu0 0.0
          %760 = vmatprep.subr.mxu0 0.0
          %761 = vmatpush1.xpose.msra.mxu0 0.0
          %762 = vmatprep.subr.mxu0 0.0
          %763 = vmatpush1.xpose.msra.mxu0 0.0
          %764 = vmatprep.subr.mxu0 0.0
          %765 = vmatpush1.xpose.msra.mxu0 0.0
          %766 = vmatprep.subr.mxu0 0.0
          %767 = vmatpush1.xpose.msra.mxu0 0.0
          %768 = vmatprep.subr.mxu0 0.0
          %769 = vmatpush1.xpose.msra.mxu0 0.0
          %770 = vmatprep.subr.mxu0 0.0
          %771 = vmatpush1.xpose.msra.mxu0 0.0
          %772 = vmatprep.subr.mxu0 0.0
          %773 = vmatpush1.xpose.msra.mxu0 0.0
          %774 = vmatprep.subr.mxu0 0.0
          %775 = vmatpush1.xpose.msra.mxu0 0.0
          %776 = vmatprep.subr.mxu0 0.0
          %777 = vmatpush1.xpose.msra.mxu0 0.0
          %778 = vmatprep.subr.mxu0 0.0
          %779 = vmatpush1.xpose.msra.mxu0 0.0
          %780 = vmatprep.subr.mxu0 0.0
          %781 = vmatpush1.xpose.msra.mxu0 0.0
          %782 = vmatprep.subr.mxu0 0.0
          %783 = vmatpush1.xpose.msra.mxu0 0.0
          %784 = vmatprep.subr.mxu0 0.0
          %785 = vmatpush1.xpose.msra.mxu0 0.0
          %786 = vmatprep.subr.mxu0 0.0
          %787 = vmatpush1.xpose.msra.mxu0 0.0
          %788 = vmatprep.subr.mxu0 0.0
          %789 = vmatpush1.xpose.msra.mxu0 0.0
          %790 = vmatprep.subr.mxu0 0.0
          %791 = vmatpush1.xpose.msra.mxu0 0.0
          %792 = vmatprep.mubr.f32.mxu0 0.0
          %793 = vmatmul.mubr.f32.gmra.mrb[0].mxu0 %v702
          %v794 = vpop.f32.mrb[0].mxu0
          %v795 = vadd.f32 0.0, %v794
          %v796 = vpop.f32.mrb[0].mxu0
          %797 = vdwg.mxu0
          %v798 = vlaneseq
          %v799 = vshrl.u32 %v798, 7
          %v800 = vsub.s32 0, %v799
          %v801 = vrot.slane %v795, %v800
          %v802 = vadd.f32 %v697, %v801
          %v803 = vadd.f32 %v700, %v801
          %v804 = vstv %s685
          %v805 = vadd.f32 %v802, %v804
          %v806 = vadd.f32 %v803, %v804
          %vm807 = vcmp.ge.f32.partialorder %v805, 0.0
          %vm808 = vcmp.ge.f32.partialorder %v806, 0.0
          %v809 = vmul.f32 %v805, 0.05
          %v810 = vmul.f32 %v806, 0.05
          %v811 = vsel %vm807, %v805, %v809
          %v812 = vsel %vm808, %v806, %v810
          %vm813 = vcmp.ne.f32.partialorder %v670, 0.0
          %vm814 = vcmp.ne.f32.partialorder %v671, 0.0
          %v815 = vsel %vm813, %v811, -inf
          %v816 = vsel %vm814, %v812, -inf
          %vm817 = vcmask 523264
          %v818 = vsel %vm817, %v815, -inf
          %819 = vmax.xlane.f32.xlu0 %v818
          %v820 = vpop.xlane.xlu0 %819
          %v821 = vsel %vm817, %v816, -inf
          %822 = vmax.xlane.f32.xlu0 %v821
          %v823 = vpop.xlane.xlu0 %822
          %vm824 = vcmp.eq.f32.partialorder %v820, -inf
          %vm825 = vcmp.eq.f32.partialorder %v823, -inf
          %v826 = vsel %vm824, 0.0, %v820
          %v827 = vsel %vm825, 0.0, %v823
          %v828 = vsub.f32 %v815, %v826
          %v829 = vsub.f32 %v816, %v827
          %v830 = vmul.f32 %v828, 1.442695
          %v831 = vpow.pop %v830
          %v832 = vmul.f32 %v829, 1.442695
          %v833 = vpow.pop %v832
          %v834 = vsel %vm817, %v831, 0.0
          %835 = vadd.xlane.f32.xlu0 %v834
          %v836 = vpop.xlane.xlu0 %835
          %v837 = vsel %vm817, %v833, 0.0
          %838 = vadd.xlane.f32.xlu0 %v837
          %v839 = vpop.xlane.xlu0 %838
          %vm840 = vcmp.eq.f32.partialorder %v836, 0.0
          %vm841 = vcmp.eq.f32.partialorder %v839, 0.0
          %v842 = vsel %vm840, 1.0, %v836
          %v843 = vsel %vm841, 1.0, %v839
          %v844 = vrcp.pop %v842
          %v845 = vrcp.pop %v843
          %v846 = vmul.f32 %v831, %v844
          %v847 = vmul.f32 %v833, %v845
          %v848 = vmul.f32 %v670, %v846
          %v849 = vmul.f32 %v671, %v847
          %v851 = vsel %vm817, %v848, 0
          %v854 = vsel %vm817, %v849, 0
          %856 = vmatprep.subr.mxu0 0.0
          %857 = vmatpush1.msra.mxu0 %v675
          %858 = vmatprep.subr.mxu0 0.0
          %859 = vmatpush1.msra.mxu0 %v676
          %860 = vmatprep.subr.mxu0 0.0
          %861 = vmatpush1.msra.mxu0 %v677
          %862 = vmatprep.subr.mxu0 0.0
          %863 = vmatpush1.msra.mxu0 %v678
          %864 = vmatprep.subr.mxu0 0.0
          %865 = vmatpush1.msra.mxu0 %v679
          %866 = vmatprep.subr.mxu0 0.0
          %867 = vmatpush1.msra.mxu0 %v680
          %868 = vmatprep.subr.mxu0 0.0
          %869 = vmatpush1.msra.mxu0 %v681
          %870 = vmatprep.subr.mxu0 0.0
          %871 = vmatpush1.msra.mxu0 %v682
          %872 = vmatprep.subr.mxu0 0.0
          %873 = vmatpush1.msra.mxu0 0.0
          %874 = vmatprep.subr.mxu0 0.0
          %875 = vmatpush1.msra.mxu0 0.0
          %876 = vmatprep.subr.mxu0 0.0
          %877 = vmatpush1.msra.mxu0 0.0
          %878 = vmatprep.subr.mxu0 0.0
          %879 = vmatpush1.msra.mxu0 0.0
          %880 = vmatprep.subr.mxu0 0.0
          %881 = vmatpush1.msra.mxu0 0.0
          %882 = vmatprep.subr.mxu0 0.0
          %883 = vmatpush1.msra.mxu0 0.0
          %884 = vmatprep.subr.mxu0 0.0
          %885 = vmatpush1.msra.mxu0 0.0
          %886 = vmatprep.subr.mxu0 0.0
          %887 = vmatpush1.msra.mxu0 0.0
          %888 = vmatprep.subr.mxu0 0.0
          %889 = vmatpush1.msra.mxu0 0.0
          %890 = vmatprep.subr.mxu0 0.0
          %891 = vmatpush1.msra.mxu0 0.0
          %892 = vmatprep.subr.mxu0 0.0
          %893 = vmatpush1.msra.mxu0 0.0
          %894 = vmatprep.subr.mxu0 0.0
          %895 = vmatpush1.msra.mxu0 0.0
          %896 = vmatprep.subr.mxu0 0.0
          %897 = vmatpush1.msra.mxu0 0.0
          %898 = vmatprep.subr.mxu0 0.0
          %899 = vmatpush1.msra.mxu0 0.0
          %900 = vmatprep.subr.mxu0 0.0
          %901 = vmatpush1.msra.mxu0 0.0
          %902 = vmatprep.subr.mxu0 0.0
          %903 = vmatpush1.msra.mxu0 0.0
          %904 = vmatprep.subr.mxu0 0.0
          %905 = vmatpush1.msra.mxu0 0.0
          %906 = vmatprep.subr.mxu0 0.0
          %907 = vmatpush1.msra.mxu0 0.0
          %908 = vmatprep.subr.mxu0 0.0
          %909 = vmatpush1.msra.mxu0 0.0
          %910 = vmatprep.subr.mxu0 0.0
          %911 = vmatpush1.msra.mxu0 0.0
          %912 = vmatprep.subr.mxu0 0.0
          %913 = vmatpush1.msra.mxu0 0.0
          %914 = vmatprep.subr.mxu0 0.0
          %915 = vmatpush1.msra.mxu0 0.0
          %916 = vmatprep.subr.mxu0 0.0
          %917 = vmatpush1.msra.mxu0 0.0
          %918 = vmatprep.subr.mxu0 0.0
          %919 = vmatpush1.msra.mxu0 0.0
          %920 = vmatprep.mubr.f32.mxu0 0.0
          %921 = vmatmul.mubr.f32.gmra.mrb[0].mxu0 %v851
          %v922 = vpop.f32.mrb[0].mxu0
          %v923 = vadd.f32 0.0, %v922
          %v924 = vpop.f32.mrb[0].mxu0
          %925 = vmatprep.mubr.f32.mxu0 0.0
          %926 = vmatmul.mubr.f32.gmra.mrb[0].mxu0 %v854
          %v927 = vpop.f32.mrb[0].mxu0
          %v928 = vadd.f32 0.0, %v927
          %v929 = vpop.f32.mrb[0].mxu0
          %930 = vdwg.mxu0
          %v931 = vmax.f32 %v923, 0.0
          %v932 = vmax.f32 %v928, 0.0
          %v933 = vld [vmem:[#allocation6] sm:$0xff]
          %v934 = vld [vmem:[#allocation6 + $0x8] sm:$0xff]
          %v935 = vld [vmem:[#allocation6 + $0x10] sm:$0xff]
          %v936 = vld [vmem:[#allocation6 + $0x18] sm:$0xff]
          %v938 = vsel %vm694, %v931, 0
          %v941 = vsel %vm694, %v932, 0
          %943 = vmatprep.subr.mxu0 0.0
          %944 = vmatpush1.msra.mxu0 %v933
          %945 = vmatprep.subr.mxu0 0.0
          %946 = vmatpush1.msra.mxu0 %v934
          %947 = vmatprep.subr.mxu0 0.0
          %948 = vmatpush1.msra.mxu0 %v935
          %949 = vmatprep.subr.mxu0 0.0
          %950 = vmatpush1.msra.mxu0 %v936
          %951 = vmatprep.subr.mxu0 0.0
          %952 = vmatpush1.msra.mxu0 0.0
          %953 = vmatprep.subr.mxu0 0.0
          %954 = vmatpush1.msra.mxu0 0.0
          %955 = vmatprep.subr.mxu0 0.0
          %956 = vmatpush1.msra.mxu0 0.0
          %957 = vmatprep.subr.mxu0 0.0
          %958 = vmatpush1.msra.mxu0 0.0
          %959 = vmatprep.subr.mxu0 0.0
          %960 = vmatpush1.msra.mxu0 0.0
          %961 = vmatprep.subr.mxu0 0.0
          %962 = vmatpush1.msra.mxu0 0.0
          %963 = vmatprep.subr.mxu0 0.0
          %964 = vmatpush1.msra.mxu0 0.0
          %965 = vmatprep.subr.mxu0 0.0
          %966 = vmatpush1.msra.mxu0 0.0
          %967 = vmatprep.subr.mxu0 0.0
          %968 = vmatpush1.msra.mxu0 0.0
          %969 = vmatprep.subr.mxu0 0.0
          %970 = vmatpush1.msra.mxu0 0.0
          %971 = vmatprep.subr.mxu0 0.0
          %972 = vmatpush1.msra.mxu0 0.0
          %973 = vmatprep.subr.mxu0 0.0
          %974 = vmatpush1.msra.mxu0 0.0
          %975 = vmatprep.subr.mxu0 0.0
          %976 = vmatpush1.msra.mxu0 0.0
          %977 = vmatprep.subr.mxu0 0.0
          %978 = vmatpush1.msra.mxu0 0.0
          %979 = vmatprep.subr.mxu0 0.0
          %980 = vmatpush1.msra.mxu0 0.0
          %981 = vmatprep.subr.mxu0 0.0
          %982 = vmatpush1.msra.mxu0 0.0
          %983 = vmatprep.subr.mxu0 0.0
          %984 = vmatpush1.msra.mxu0 0.0
          %985 = vmatprep.subr.mxu0 0.0
          %986 = vmatpush1.msra.mxu0 0.0
          %987 = vmatprep.subr.mxu0 0.0
          %988 = vmatpush1.msra.mxu0 0.0
          %989 = vmatprep.subr.mxu0 0.0
          %990 = vmatpush1.msra.mxu0 0.0
          %991 = vmatprep.subr.mxu0 0.0
          %992 = vmatpush1.msra.mxu0 0.0
          %993 = vmatprep.subr.mxu0 0.0
          %994 = vmatpush1.msra.mxu0 0.0
          %995 = vmatprep.subr.mxu0 0.0
          %996 = vmatpush1.msra.mxu0 0.0
          %997 = vmatprep.subr.mxu0 0.0
          %998 = vmatpush1.msra.mxu0 0.0
          %999 = vmatprep.subr.mxu0 0.0
          %1000 = vmatpush1.msra.mxu0 0.0
          %1001 = vmatprep.subr.mxu0 0.0
          %1002 = vmatpush1.msra.mxu0 0.0
          %1003 = vmatprep.subr.mxu0 0.0
          %1004 = vmatpush1.msra.mxu0 0.0
          %1005 = vmatprep.subr.mxu0 0.0
          %1006 = vmatpush1.msra.mxu0 0.0
          %1007 = vmatprep.mubr.f32.mxu0 0.0
          %1008 = vmatmul.mubr.f32.gmra.mrb[0].mxu0 %v938
          %v1009 = vpop.f32.mrb[0].mxu0
          %v1010 = vadd.f32 0.0, %v1009
          %v1011 = vpop.f32.mrb[0].mxu0
          %1012 = vmatprep.mubr.f32.mxu0 0.0
          %1013 = vmatmul.mubr.f32.gmra.mrb[0].mxu0 %v941
          %v1014 = vpop.f32.mrb[0].mxu0
          %v1015 = vadd.f32 0.0, %v1014
          %v1016 = vpop.f32.mrb[0].mxu0
          %1017 = vdwg.mxu0
          %s1018 = scalar_lea.vmem [#allocation3], %s570
          %1019 = vst.msk [vmem:[%s1018] sm:$0xff] %vm694, %v1010
          %1020 = vst.msk [vmem:[%s1018 + $0x8] sm:$0xff] %vm694, %v1015
        $region88: #{tpu_custom_call.1} parent=67 // pred_fallthru
          _
        %p1021 = scmp.eq.s32.totalorder %s39, 2
        // Predicated region
        $region89: #{tpu_custom_call.1} parent=67 // pred_check
          %p1022 = pneg %p1021
        $region90: #{tpu_custom_call.1} parent=67 // pred_check_branch
          %1024 = sbr.rel (%p1022) target = $region92
        $region91: #{tpu_custom_call.1} parent=67 // pred_region
          %v1025 = vld [vmem:[%s560] sm:$0xff]
          %v1026 = vld [vmem:[%s560 + $0x8] sm:$0xff]
          %s1027 = scalar_lea.vmem [#allocation3], %s570
          %v1028 = vld [vmem:[%s1027] sm:$0xff]
          %v1029 = vld [vmem:[%s1027 + $0x8] sm:$0xff]
          %v1030 = vld [vmem:[#allocation3] sm:$0xff]
          %v1031 = vld [vmem:[#allocation3 + $0x8] sm:$0xff]
          %v1032 = vld [vmem:[#allocation3 + $0x10] sm:$0xff]
          %v1033 = vld [vmem:[#allocation3 + $0x18] sm:$0xff]
          %v1034 = vld [vmem:[#allocation3 + $0x20] sm:$0xff]
          %v1035 = vld [vmem:[#allocation3 + $0x28] sm:$0xff]
          %v1036 = vld [vmem:[#allocation3 + $0x30] sm:$0xff]
          %v1037 = vld [vmem:[#allocation3 + $0x38] sm:$0xff]
          %v1038 = vld [vmem:[#allocation9] sm:$0x1]
          %v1039 = vld [vmem:[#allocation11] sm:$0x1]
          %s1040 = sld [smem:[#allocation5]]
          %v1042 = vlaneseq
          %v1043 = vshrl.u32 %v1042, 7
          %v1044 = vsub.s32 0, %v1043
          %v1045 = vrot.slane %v1038, %v1044
          %v1047 = vmul.f32 %v1028, %v1045
          %v1048 = vmul.f32 %v1029, %v1045
          %vm1049 = vcmask 261120
          %v1050 = vsel %vm1049, %v1047, 0.0
          %1051 = vadd.xlane.f32.xlu0 %v1050
          %v1052 = vpop.xlane.xlu0 %1051
          %v1053 = vsel %vm1049, %v1048, 0.0
          %1054 = vadd.xlane.f32.xlu0 %v1053
          %v1055 = vpop.xlane.xlu0 %1054
          %v1057 = vsel %vm1049, %v1039, 0
          %v1060 = vsel %vm1049, %v1030, 0
          %v1063 = vsel %vm1049, %v1031, 0
          %v1066 = vsel %vm1049, %v1032, 0
          %v1069 = vsel %vm1049, %v1033, 0
          %v1072 = vsel %vm1049, %v1034, 0
          %v1075 = vsel %vm1049, %v1035, 0
          %v1078 = vsel %vm1049, %v1036, 0
          %v1081 = vsel %vm1049, %v1037, 0
          %1083 = vmatprep.subr.mxu0 0.0
          %1084 = vmatpush1.xpose.msra.mxu0 %v1060
          %1085 = vmatprep.subr.mxu0 0.0
          %1086 = vmatpush1.xpose.msra.mxu0 %v1063
          %1087 = vmatprep.subr.mxu0 0.0
          %1088 = vmatpush1.xpose.msra.mxu0 %v1066
          %1089 = vmatprep.subr.mxu0 0.0
          %1090 = vmatpush1.xpose.msra.mxu0 %v1069
          %1091 = vmatprep.subr.mxu0 0.0
          %1092 = vmatpush1.xpose.msra.mxu0 %v1072
          %1093 = vmatprep.subr.mxu0 0.0
          %1094 = vmatpush1.xpose.msra.mxu0 %v1075
          %1095 = vmatprep.subr.mxu0 0.0
          %1096 = vmatpush1.xpose.msra.mxu0 %v1078
          %1097 = vmatprep.subr.mxu0 0.0
          %1098 = vmatpush1.xpose.msra.mxu0 %v1081
          %1099 = vmatprep.subr.mxu0 0.0
          %1100 = vmatpush1.xpose.msra.mxu0 0.0
          %1101 = vmatprep.subr.mxu0 0.0
          %1102 = vmatpush1.xpose.msra.mxu0 0.0
          %1103 = vmatprep.subr.mxu0 0.0
          %1104 = vmatpush1.xpose.msra.mxu0 0.0
          %1105 = vmatprep.subr.mxu0 0.0
          %1106 = vmatpush1.xpose.msra.mxu0 0.0
          %1107 = vmatprep.subr.mxu0 0.0
          %1108 = vmatpush1.xpose.msra.mxu0 0.0
          %1109 = vmatprep.subr.mxu0 0.0
          %1110 = vmatpush1.xpose.msra.mxu0 0.0
          %1111 = vmatprep.subr.mxu0 0.0
          %1112 = vmatpush1.xpose.msra.mxu0 0.0
          %1113 = vmatprep.subr.mxu0 0.0
          %1114 = vmatpush1.xpose.msra.mxu0 0.0
          %1115 = vmatprep.subr.mxu0 0.0
          %1116 = vmatpush1.xpose.msra.mxu0 0.0
          %1117 = vmatprep.subr.mxu0 0.0
          %1118 = vmatpush1.xpose.msra.mxu0 0.0
          %1119 = vmatprep.subr.mxu0 0.0
          %1120 = vmatpush1.xpose.msra.mxu0 0.0
          %1121 = vmatprep.subr.mxu0 0.0
          %1122 = vmatpush1.xpose.msra.mxu0 0.0
          %1123 = vmatprep.subr.mxu0 0.0
          %1124 = vmatpush1.xpose.msra.mxu0 0.0
          %1125 = vmatprep.subr.mxu0 0.0
          %1126 = vmatpush1.xpose.msra.mxu0 0.0
          %1127 = vmatprep.subr.mxu0 0.0
          %1128 = vmatpush1.xpose.msra.mxu0 0.0
          %1129 = vmatprep.subr.mxu0 0.0
          %1130 = vmatpush1.xpose.msra.mxu0 0.0
          %1131 = vmatprep.subr.mxu0 0.0
          %1132 = vmatpush1.xpose.msra.mxu0 0.0
          %1133 = vmatprep.subr.mxu0 0.0
          %1134 = vmatpush1.xpose.msra.mxu0 0.0
          %1135 = vmatprep.subr.mxu0 0.0
          %1136 = vmatpush1.xpose.msra.mxu0 0.0
          %1137 = vmatprep.subr.mxu0 0.0
          %1138 = vmatpush1.xpose.msra.mxu0 0.0
          %1139 = vmatprep.subr.mxu0 0.0
          %1140 = vmatpush1.xpose.msra.mxu0 0.0
          %1141 = vmatprep.subr.mxu0 0.0
          %1142 = vmatpush1.xpose.msra.mxu0 0.0
          %1143 = vmatprep.subr.mxu0 0.0
          %1144 = vmatpush1.xpose.msra.mxu0 0.0
          %1145 = vmatprep.subr.mxu0 0.0
          %1146 = vmatpush1.xpose.msra.mxu0 0.0
          %1147 = vmatprep.mubr.f32.mxu0 0.0
          %1148 = vmatmul.mubr.f32.gmra.mrb[0].mxu0 %v1057
          %v1149 = vpop.f32.mrb[0].mxu0
          %v1150 = vadd.f32 0.0, %v1149
          %v1151 = vpop.f32.mrb[0].mxu0
          %1152 = vdwg.mxu0
          %v1153 = vlaneseq
          %v1154 = vshrl.u32 %v1153, 7
          %v1155 = vsub.s32 0, %v1154
          %v1156 = vrot.slane %v1150, %v1155
          %v1157 = vadd.f32 %v1052, %v1156
          %v1158 = vadd.f32 %v1055, %v1156
          %v1159 = vstv %s1040
          %v1160 = vadd.f32 %v1157, %v1159
          %v1161 = vadd.f32 %v1158, %v1159
          %vm1162 = vcmp.ge.f32.partialorder %v1160, 0.0
          %vm1163 = vcmp.ge.f32.partialorder %v1161, 0.0
          %v1164 = vmul.f32 %v1160, 0.05
          %v1165 = vmul.f32 %v1161, 0.05
          %v1166 = vsel %vm1162, %v1160, %v1164
          %v1167 = vsel %vm1163, %v1161, %v1165
          %vm1168 = vcmp.ne.f32.partialorder %v1025, 0.0
          %vm1169 = vcmp.ne.f32.partialorder %v1026, 0.0
          %v1170 = vsel %vm1168, %v1166, -inf
          %v1171 = vsel %vm1169, %v1167, -inf
          %vm1172 = vcmask 523264
          %v1173 = vsel %vm1172, %v1170, -inf
          %1174 = vmax.xlane.f32.xlu0 %v1173
          %v1175 = vpop.xlane.xlu0 %1174
          %v1176 = vsel %vm1172, %v1171, -inf
          %1177 = vmax.xlane.f32.xlu0 %v1176
          %v1178 = vpop.xlane.xlu0 %1177
          %vm1179 = vcmp.eq.f32.partialorder %v1175, -inf
          %vm1180 = vcmp.eq.f32.partialorder %v1178, -inf
          %v1181 = vsel %vm1179, 0.0, %v1175
          %v1182 = vsel %vm1180, 0.0, %v1178
          %v1183 = vsub.f32 %v1170, %v1181
          %v1184 = vsub.f32 %v1171, %v1182
          %v1185 = vmul.f32 %v1183, 1.442695
          %v1186 = vpow.pop %v1185
          %v1187 = vmul.f32 %v1184, 1.442695
          %v1188 = vpow.pop %v1187
          %v1189 = vsel %vm1172, %v1186, 0.0
          %1190 = vadd.xlane.f32.xlu0 %v1189
          %v1191 = vpop.xlane.xlu0 %1190
          %v1192 = vsel %vm1172, %v1188, 0.0
          %1193 = vadd.xlane.f32.xlu0 %v1192
          %v1194 = vpop.xlane.xlu0 %1193
          %vm1195 = vcmp.eq.f32.partialorder %v1191, 0.0
          %vm1196 = vcmp.eq.f32.partialorder %v1194, 0.0
          %v1197 = vsel %vm1195, 1.0, %v1191
          %v1198 = vsel %vm1196, 1.0, %v1194
          %v1199 = vrcp.pop %v1197
          %v1200 = vrcp.pop %v1198
          %v1201 = vmul.f32 %v1186, %v1199
          %v1202 = vmul.f32 %v1188, %v1200
          %v1203 = vmul.f32 %v1025, %v1201
          %v1204 = vmul.f32 %v1026, %v1202
          %v1206 = vsel %vm1172, %v1203, 0
          %v1209 = vsel %vm1172, %v1204, 0
          %1211 = vmatprep.subr.mxu0 0.0
          %1212 = vmatpush1.msra.mxu0 %v1030
          %1213 = vmatprep.subr.mxu0 0.0
          %1214 = vmatpush1.msra.mxu0 %v1031
          %1215 = vmatprep.subr.mxu0 0.0
          %1216 = vmatpush1.msra.mxu0 %v1032
          %1217 = vmatprep.subr.mxu0 0.0
          %1218 = vmatpush1.msra.mxu0 %v1033
          %1219 = vmatprep.subr.mxu0 0.0
          %1220 = vmatpush1.msra.mxu0 %v1034
          %1221 = vmatprep.subr.mxu0 0.0
          %1222 = vmatpush1.msra.mxu0 %v1035
          %1223 = vmatprep.subr.mxu0 0.0
          %1224 = vmatpush1.msra.mxu0 %v1036
          %1225 = vmatprep.subr.mxu0 0.0
          %1226 = vmatpush1.msra.mxu0 %v1037
          %1227 = vmatprep.subr.mxu0 0.0
          %1228 = vmatpush1.msra.mxu0 0.0
          %1229 = vmatprep.subr.mxu0 0.0
          %1230 = vmatpush1.msra.mxu0 0.0
          %1231 = vmatprep.subr.mxu0 0.0
          %1232 = vmatpush1.msra.mxu0 0.0
          %1233 = vmatprep.subr.mxu0 0.0
          %1234 = vmatpush1.msra.mxu0 0.0
          %1235 = vmatprep.subr.mxu0 0.0
          %1236 = vmatpush1.msra.mxu0 0.0
          %1237 = vmatprep.subr.mxu0 0.0
          %1238 = vmatpush1.msra.mxu0 0.0
          %1239 = vmatprep.subr.mxu0 0.0
          %1240 = vmatpush1.msra.mxu0 0.0
          %1241 = vmatprep.subr.mxu0 0.0
          %1242 = vmatpush1.msra.mxu0 0.0
          %1243 = vmatprep.subr.mxu0 0.0
          %1244 = vmatpush1.msra.mxu0 0.0
          %1245 = vmatprep.subr.mxu0 0.0
          %1246 = vmatpush1.msra.mxu0 0.0
          %1247 = vmatprep.subr.mxu0 0.0
          %1248 = vmatpush1.msra.mxu0 0.0
          %1249 = vmatprep.subr.mxu0 0.0
          %1250 = vmatpush1.msra.mxu0 0.0
          %1251 = vmatprep.subr.mxu0 0.0
          %1252 = vmatpush1.msra.mxu0 0.0
          %1253 = vmatprep.subr.mxu0 0.0
          %1254 = vmatpush1.msra.mxu0 0.0
          %1255 = vmatprep.subr.mxu0 0.0
          %1256 = vmatpush1.msra.mxu0 0.0
          %1257 = vmatprep.subr.mxu0 0.0
          %1258 = vmatpush1.msra.mxu0 0.0
          %1259 = vmatprep.subr.mxu0 0.0
          %1260 = vmatpush1.msra.mxu0 0.0
          %1261 = vmatprep.subr.mxu0 0.0
          %1262 = vmatpush1.msra.mxu0 0.0
          %1263 = vmatprep.subr.mxu0 0.0
          %1264 = vmatpush1.msra.mxu0 0.0
          %1265 = vmatprep.subr.mxu0 0.0
          %1266 = vmatpush1.msra.mxu0 0.0
          %1267 = vmatprep.subr.mxu0 0.0
          %1268 = vmatpush1.msra.mxu0 0.0
          %1269 = vmatprep.subr.mxu0 0.0
          %1270 = vmatpush1.msra.mxu0 0.0
          %1271 = vmatprep.subr.mxu0 0.0
          %1272 = vmatpush1.msra.mxu0 0.0
          %1273 = vmatprep.subr.mxu0 0.0
          %1274 = vmatpush1.msra.mxu0 0.0
          %1275 = vmatprep.mubr.f32.mxu0 0.0
          %1276 = vmatmul.mubr.f32.gmra.mrb[0].mxu0 %v1206
          %v1277 = vpop.f32.mrb[0].mxu0
          %v1278 = vadd.f32 0.0, %v1277
          %v1279 = vpop.f32.mrb[0].mxu0
          %1280 = vmatprep.mubr.f32.mxu0 0.0
          %1281 = vmatmul.mubr.f32.gmra.mrb[0].mxu0 %v1209
          %v1282 = vpop.f32.mrb[0].mxu0
          %v1283 = vadd.f32 0.0, %v1282
          %v1284 = vpop.f32.mrb[0].mxu0
          %1285 = vdwg.mxu0
          %1286 = vst.msk [vmem:[%s543] sm:$0xff] %vm1172, %v1201
          %1287 = vst.msk [vmem:[%s543 + $0x8] sm:$0xff] %vm1172, %v1202
          %v1288 = vmax.f32 %v1278, 0.0
          %v1289 = vmax.f32 %v1283, 0.0
          %v1290 = vld [vmem:[%s10] sm:$0xff]
          %v1291 = vld [vmem:[%s10 + $0x8] sm:$0xff]
          %v1292 = vld [vmem:[%s10 + $0x10] sm:$0xff]
          %v1293 = vld [vmem:[%s10 + $0x18] sm:$0xff]
          %v1294 = vld [vmem:[%s11] sm:$0x1]
          %v1296 = vlaneseq
          %v1297 = vshrl.u32 %v1296, 7
          %v1298 = vsub.s32 0, %v1297
          %v1299 = vrot.slane %v1294, %v1298
          %v1302 = vsel %vm1049, %v1288, 0
          %v1305 = vsel %vm1049, %v1289, 0
          %1307 = vmatprep.subr.mxu0 0.0
          %1308 = vmatpush1.msra.mxu0 %v1290
          %1309 = vmatprep.subr.mxu0 0.0
          %1310 = vmatpush1.msra.mxu0 %v1291
          %1311 = vmatprep.subr.mxu0 0.0
          %1312 = vmatpush1.msra.mxu0 %v1292
          %1313 = vmatprep.subr.mxu0 0.0
          %1314 = vmatpush1.msra.mxu0 %v1293
          %1315 = vmatprep.subr.mxu0 0.0
          %1316 = vmatpush1.msra.mxu0 0.0
          %1317 = vmatprep.subr.mxu0 0.0
          %1318 = vmatpush1.msra.mxu0 0.0
          %1319 = vmatprep.subr.mxu0 0.0
          %1320 = vmatpush1.msra.mxu0 0.0
          %1321 = vmatprep.subr.mxu0 0.0
          %1322 = vmatpush1.msra.mxu0 0.0
          %1323 = vmatprep.subr.mxu0 0.0
          %1324 = vmatpush1.msra.mxu0 0.0
          %1325 = vmatprep.subr.mxu0 0.0
          %1326 = vmatpush1.msra.mxu0 0.0
          %1327 = vmatprep.subr.mxu0 0.0
          %1328 = vmatpush1.msra.mxu0 0.0
          %1329 = vmatprep.subr.mxu0 0.0
          %1330 = vmatpush1.msra.mxu0 0.0
          %1331 = vmatprep.subr.mxu0 0.0
          %1332 = vmatpush1.msra.mxu0 0.0
          %1333 = vmatprep.subr.mxu0 0.0
          %1334 = vmatpush1.msra.mxu0 0.0
          %1335 = vmatprep.subr.mxu0 0.0
          %1336 = vmatpush1.msra.mxu0 0.0
          %1337 = vmatprep.subr.mxu0 0.0
          %1338 = vmatpush1.msra.mxu0 0.0
          %1339 = vmatprep.subr.mxu0 0.0
          %1340 = vmatpush1.msra.mxu0 0.0
          %1341 = vmatprep.subr.mxu0 0.0
          %1342 = vmatpush1.msra.mxu0 0.0
          %1343 = vmatprep.subr.mxu0 0.0
          %1344 = vmatpush1.msra.mxu0 0.0
          %1345 = vmatprep.subr.mxu0 0.0
          %1346 = vmatpush1.msra.mxu0 0.0
          %1347 = vmatprep.subr.mxu0 0.0
          %1348 = vmatpush1.msra.mxu0 0.0
          %1349 = vmatprep.subr.mxu0 0.0
          %1350 = vmatpush1.msra.mxu0 0.0
          %1351 = vmatprep.subr.mxu0 0.0
          %1352 = vmatpush1.msra.mxu0 0.0
          %1353 = vmatprep.subr.mxu0 0.0
          %1354 = vmatpush1.msra.mxu0 0.0
          %1355 = vmatprep.subr.mxu0 0.0
          %1356 = vmatpush1.msra.mxu0 0.0
          %1357 = vmatprep.subr.mxu0 0.0
          %1358 = vmatpush1.msra.mxu0 0.0
          %1359 = vmatprep.subr.mxu0 0.0
          %1360 = vmatpush1.msra.mxu0 0.0
          %1361 = vmatprep.subr.mxu0 0.0
          %1362 = vmatpush1.msra.mxu0 0.0
          %1363 = vmatprep.subr.mxu0 0.0
          %1364 = vmatpush1.msra.mxu0 0.0
          %1365 = vmatprep.subr.mxu0 0.0
          %1366 = vmatpush1.msra.mxu0 0.0
          %1367 = vmatprep.subr.mxu0 0.0
          %1368 = vmatpush1.msra.mxu0 0.0
          %1369 = vmatprep.subr.mxu0 0.0
          %1370 = vmatpush1.msra.mxu0 0.0
          %1371 = vmatprep.mubr.f32.mxu0 0.0
          %1372 = vmatmul.mubr.f32.gmra.mrb[0].mxu0 %v1302
          %v1373 = vpop.f32.mrb[0].mxu0
          %v1374 = vadd.f32 %v1299, %v1373
          %v1375 = vpop.f32.mrb[0].mxu0
          %1376 = vmatprep.mubr.f32.mxu0 0.0
          %1377 = vmatmul.mubr.f32.gmra.mrb[0].mxu0 %v1305
          %v1378 = vpop.f32.mrb[0].mxu0
          %v1379 = vadd.f32 %v1299, %v1378
          %v1380 = vpop.f32.mrb[0].mxu0
          %1381 = vdwg.mxu0
          %v1382 = vlaneseq
          %v1383 = vand.u32 %v1382, 127
          %vm1384 = vcmp.lt.s32.totalorder %v1383, 7
          %v1385 = vsel %vm1384, %v1374, -inf
          %v1386 = vsel %vm1384, %v1379, -inf
          %1387 = vmax.xlane.f32.xlu0 %v1385
          %v1388 = vpop.xlane.xlu0 %1387
          %1389 = vmax.xlane.f32.xlu0 %v1386
          %v1390 = vpop.xlane.xlu0 %1389
          %v1391 = vsub.f32 %v1385, %v1388
          %v1392 = vsub.f32 %v1386, %v1390
          %v1393 = vmul.f32 %v1391, 1.442695
          %v1394 = vpow.pop %v1393
          %v1395 = vmul.f32 %v1392, 1.442695
          %v1396 = vpow.pop %v1395
          %1397 = vadd.xlane.f32.xlu0 %v1394
          %v1398 = vpop.xlane.xlu0 %1397
          %1399 = vadd.xlane.f32.xlu0 %v1396
          %v1400 = vpop.xlane.xlu0 %1399
          %v1401 = vlog2.pop %v1398
          %v1402 = vmul.f32 %v1401, 0.6931472
          %v1403 = vlog2.pop %v1400
          %v1404 = vmul.f32 %v1403, 0.6931472
          %v1405 = vadd.f32 %v1388, %v1402
          %v1406 = vadd.f32 %v1390, %v1404
          %v1407 = vsub.f32 %v1374, %v1405
          %v1408 = vsub.f32 %v1379, %v1406
          %1409 = vst [vmem:[%s536] sm:$0xff] %v1407
          %1410 = vst [vmem:[%s536 + $0x8] sm:$0xff] %v1408
        $region92: #{tpu_custom_call.1} parent=67 // pred_fallthru
          _
        %s1411 = sand.u32 %s329, 1
        %s1412 = scalar_lea.sflag [#allocation8], %s1411
        %s1413 = sand.u32 %s329, 1
        %s1414 = smul.addr %s1413, 16
        %s1415 = scalar_lea.vmem [#allocation12], %s1414
        %s1416 = sand.u32 %s359, 1
        %s1417 = scalar_lea.sflag [#allocation14], %s1416
        %s1418 = sand.u32 %s359, 1
        %s1419 = smul.addr %s1418, 16
        %s1420 = scalar_lea.vmem [#allocation13], %s1419
        // Predicated region
        $region93: #{tpu_custom_call.1} parent=67 // pred_check
          %p1421 = pneg %p339
        $region94: #{tpu_custom_call.1} parent=67 // pred_check_branch
          %1423 = sbr.rel (%p1421) target = $region96
        $region95: #{tpu_custom_call.1} parent=67 // pred_region
          %p1424 = scmp.eq.s32.totalorder %s39, 2
          %s1425 = scalar_select %p1424, %s40, 0
          %s1426 = smul.u32 2, %s1425
          %s1428 = ssub.s32 256, 256
          %1429 = vsyncadd %s1412, %s1428
          %s1430 = smul.addr %s1426, 128
          %s1431 = scalar_lea.hbm %s12, %s1430
          %s1432 = sshll.u32 %s1415, 4
          %s1433 = int_to_ptr.vmem [resolvable:$true] %s1432
          %1438 = dma.vmem_to_hbm [thread:$0]  %s1433, 256, %s1431, %s1412, 128, 128, 8
        $region96: #{tpu_custom_call.1} parent=67 // pred_fallthru
          _
        // Predicated region
        $region97: #{tpu_custom_call.1} parent=67 // pred_check
          %p1439 = pneg %p369
        $region98: #{tpu_custom_call.1} parent=67 // pred_check_branch
          %1441 = sbr.rel (%p1439) target = $region100
        $region99: #{tpu_custom_call.1} parent=67 // pred_region
          %p1442 = scmp.eq.s32.totalorder %s39, 2
          %s1443 = scalar_select %p1442, %s40, 0
          %s1444 = smul.u32 2, %s1443
          %s1446 = ssub.s32 256, 256
          %1447 = vsyncadd %s1417, %s1446
          %s1448 = smul.addr %s1444, 128
          %s1449 = scalar_lea.hbm %s13, %s1448
          %s1450 = sshll.u32 %s1420, 4
          %s1451 = int_to_ptr.vmem [resolvable:$true] %s1450
          %1456 = dma.vmem_to_hbm [thread:$0]  %s1451, 256, %s1449, %s1417, 128, 128, 8
        $region100: #{tpu_custom_call.1} parent=67 // pred_fallthru
          _
      $region68: #{tpu_custom_call.1} parent=5 // pred_fallthru
        _
      %p1457 = scmp.le.s32.totalorder 2, %s30
      // Predicated region
      $region101: #{tpu_custom_call.1} parent=5 // pred_check
        %p1458 = pneg %p1457
      $region102: #{tpu_custom_call.1} parent=5 // pred_check_branch
        %1460 = sbr.rel (%p1458) target = $region104
      $region103: #{tpu_custom_call.1} parent=5 // pred_region
        %s1461 = ssub.s32 %s30, 2
        // Predicated region
        $region105: #{tpu_custom_call.1} parent=103 // pred_check
          %p1462 = pneg %p345
        $region106: #{tpu_custom_call.1} parent=103 // pred_check_branch
          %1464 = sbr.rel (%p1462) target = $region108
        $region107: #{tpu_custom_call.1} parent=103 // pred_region
          %s1465 = sand.u32 %s330, 1
          %s1466 = scalar_lea.sflag [#allocation8], %s1465
          %s1467 = sand.u32 %s330, 1
          %s1468 = smul.addr %s1467, 16
          %s1469 = scalar_lea.vmem [#allocation12], %s1468
          %1470 = dma.done %s1466, 256
        $region108: #{tpu_custom_call.1} parent=103 // pred_fallthru
          _
        // Predicated region
        $region109: #{tpu_custom_call.1} parent=103 // pred_check
          %p1471 = pneg %p375
        $region110: #{tpu_custom_call.1} parent=103 // pred_check_branch
          %1473 = sbr.rel (%p1471) target = $region112
        $region111: #{tpu_custom_call.1} parent=103 // pred_region
          %s1474 = sand.u32 %s360, 1
          %s1475 = scalar_lea.sflag [#allocation14], %s1474
          %s1476 = sand.u32 %s360, 1
          %s1477 = smul.addr %s1476, 16
          %s1478 = scalar_lea.vmem [#allocation13], %s1477
          %1479 = dma.done %s1475, 256
        $region112: #{tpu_custom_call.1} parent=103 // pred_fallthru
          _
      $region104: #{tpu_custom_call.1} parent=5 // pred_fallthru
        _
    $region6: #{tpu_custom_call.1} parent=1 // loop_footer
      %s34 = sadd.s32 1, %s30
    $region7: #{tpu_custom_call.1} parent=1 // loop_footer_branch
      %29 = sbr.rel target = $region3
    $region8: #{tpu_custom_call.1} parent=1 // loop_exit
      _
    %1480 = vsyncpa [#allocation7], 1
    %s1481 = scalar_lea.sflag [#allocation7], 1
    %1482 = vsyncpa %s1481, 1
    %1483 = vsyncpa [#allocation10], 1
    %1484 = vsyncpa [#allocation8], 1
    %s1485 = scalar_lea.sflag [#allocation8], 1
    %1486 = vsyncpa %s1485, 1
    %1487 = vsyncpa [#allocation14], 1
    %s1488 = scalar_lea.sflag [#allocation14], 1
    %1489 = vsyncpa %s1488, 1

</llo_original>
